<compile_context>
chip_gen: v5e
topology: v5e:2x2
jax: 0.10.0
libtpu: 0.0.40
codegen_flags: <defaults>
</compile_context>

<pallas_src>
import math
from functools import partial

import jax
import jax.numpy as jnp
from jax.experimental import pallas as pl
from jax.experimental.pallas import tpu as pltpu


# ----------------------------- in-kernel helpers -----------------------------

def _erf_f32(x):
    # Abramowitz & Stegun 7.1.26 polynomial, |abs err| < 1.5e-7 (~f32 eps).
    a1, a2, a3, a4, a5 = (0.254829592, -0.284496736, 1.421413741,
                          -1.453152027, 1.061405429)
    p = 0.3275911
    s = jnp.where(x >= 0.0, 1.0, -1.0)
    ax = jnp.abs(x)
    t = 1.0 / (1.0 + p * ax)
    poly = ((((a5 * t + a4) * t + a3) * t + a2) * t + a1) * t
    return s * (1.0 - poly * jnp.exp(-ax * ax))


def _gelu_exact(x):
    return 0.5 * x * (1.0 + _erf_f32(x * (1.0 / math.sqrt(2.0))))


def _layer_norm(x, gamma, beta, eps=1e-5):
    mean = jnp.mean(x, axis=-1, keepdims=True)
    var = jnp.mean((x - mean) ** 2, axis=-1, keepdims=True)
    return (x - mean) * jax.lax.rsqrt(var + eps) * gamma + beta


# --------------------------------- kernel ------------------------------------

def encoder_block_kernel(x_ref, wq_ref, wk_ref, wv_ref, wo_ref,
                         ln1g_ref, ln1b_ref, w1_ref, b1_ref,
                         w2_ref, b2_ref, ln2g_ref, ln2b_ref,
                         o_ref, k_sc, v_sc, *, tile_t):
    t = pl.program_id(1)
    H, T, dh = k_sc.shape
    E = x_ref.shape[-1]

    # Project K/V for the whole sequence once per batch element (t == 0) and
    # keep them resident in bf16 scratch for every query tile of this batch.
    @pl.when(t == 0)
    def _():
        xb_all = x_ref[...].astype(jnp.bfloat16)            # [T, E]
        xh_all = jnp.broadcast_to(xb_all[None], (H, T, E))   # head-batched view
        k_sc[...] = jnp.einsum(
            "hte,hed->htd", xh_all, wk_ref[...],
            preferred_element_type=jnp.float32).astype(jnp.bfloat16)
        v_sc[...] = jnp.einsum(
            "hte,hed->htd", xh_all, wv_ref[...],
            preferred_element_type=jnp.float32).astype(jnp.bfloat16)

    row0 = pl.multiple_of(t * tile_t, tile_t)
    xt = x_ref[pl.ds(row0, tile_t), :]                       # [tile_t, E] f32
    xtb = xt.astype(jnp.bfloat16)
    xth = jnp.broadcast_to(xtb[None], (H, tile_t, E))

    # Q projection — the module's sqrt(d_head) factor is folded into wq.
    q = jnp.einsum("hte,hed->htd", xth, wq_ref[...],
                   preferred_element_type=jnp.float32).astype(jnp.bfloat16)

    # Attention scores + softmax (f32 elementwise; exp / reciprocal on EUP).
    energy = jnp.einsum("hid,hjd->hij", q, k_sc[...],
                        preferred_element_type=jnp.float32)  # [H, tile_t, T]
    energy = energy - jnp.max(energy, axis=-1, keepdims=True)
    p = jnp.exp(energy)
    attn = (p * pl.reciprocal(jnp.sum(p, axis=-1, keepdims=True),
                              approx=True)).astype(jnp.bfloat16)

    ctx = jnp.einsum("hij,hjd->hid", attn, v_sc[...],
                     preferred_element_type=jnp.float32).astype(jnp.bfloat16)

    # Output projection: per-head [tile_t, dh] @ [dh, E], summed over heads —
    # replaces the old concatenate + single [T, E] @ [E, E] matmul.
    mha = jnp.einsum("htd,hde->hte", ctx, wo_ref[...],
                     preferred_element_type=jnp.float32).sum(axis=0)

    # TODO(synk): nn.Dropout layers are identity here (eval-mode semantics);
    # training-mode random masks are not implemented.
    x1 = _layer_norm(xt + mha, ln1g_ref[...], ln1b_ref[...])

    h1 = jnp.dot(x1.astype(jnp.bfloat16), w1_ref[...],
                 preferred_element_type=jnp.float32) + b1_ref[...]
    h1 = _gelu_exact(h1)
    h2 = jnp.dot(h1.astype(jnp.bfloat16), w2_ref[...],
                 preferred_element_type=jnp.float32) + b2_ref[...]

    x2 = _layer_norm(x1 + h2, ln2g_ref[...], ln2b_ref[...])
    o_ref[...] = x2.astype(o_ref.dtype)


# --------------------------------- wrapper -----------------------------------

def _const_spec(a):
    n = a.ndim
    return pl.BlockSpec(a.shape, lambda b, t: (0,) * n)


def transformer_encoder_block(x, params, head_num):
    B, T, E = x.shape
    mlp_dim = params["w1"].shape[0]
    assert E % head_num == 0
    dh = E // head_num
    dk_scale = float(dh ** 0.5)   # NOTE: torch module MULTIPLIES by sqrt(d_head)

    tile_t = T if T <= 128 else 128
    assert T % tile_t == 0, "T must be a multiple of the token tile"
    n_t = T // tile_t

    # Decode the fused torch qkv weight ([3E, E], out index laid out (d, k, h)
    # per the einops pattern) into per-head [H, E, dh] slabs, fold the
    # sqrt(d_head) scale into Q, and cast every matmul weight to bf16.
    w4 = params["w_qkv"].reshape(dh, 3, head_num, E)             # (d, k, h, in)
    per_head = lambda w: jnp.transpose(w, (1, 2, 0))             # -> (h, in, d)
    wq = (per_head(w4[:, 0]) * dk_scale).astype(jnp.bfloat16)
    wk = per_head(w4[:, 1]).astype(jnp.bfloat16)
    wv = per_head(w4[:, 2]).astype(jnp.bfloat16)
    wo = params["w_out"].T.reshape(head_num, dh, E).astype(jnp.bfloat16)
    w1 = params["w1"].T.astype(jnp.bfloat16)                     # [E, mlp]
    w2 = params["w2"].T.astype(jnp.bfloat16)                     # [mlp, E]
    b1 = params["b1"].reshape(1, mlp_dim).astype(jnp.float32)
    b2 = params["b2"].reshape(1, E).astype(jnp.float32)
    ln1g = params["ln1_g"].reshape(1, E).astype(jnp.float32)
    ln1b = params["ln1_b"].reshape(1, E).astype(jnp.float32)
    ln2g = params["ln2_g"].reshape(1, E).astype(jnp.float32)
    ln2b = params["ln2_b"].reshape(1, E).astype(jnp.float32)

    weights = (wq, wk, wv, wo, ln1g, ln1b, w1, b1, w2, b2, ln2g, ln2b)

    # Explicit VMEM budget: double-buffered weight blocks + x/out blocks +
    # K/V scratch + headroom for live intermediates.
    w_bytes = sum(2 * int(w.size) * w.dtype.itemsize for w in weights)
    act_bytes = (2 * T * E * 4 + 2 * tile_t * E * 4
                 + 2 * head_num * T * dh * 2
                 + 8 * head_num * tile_t * max(T, E, mlp_dim) * 4)
    vmem_limit = int(min(max(4 * 2**20 + w_bytes + act_bytes, 16 * 2**20),
                         64 * 2**20))

    flops = B * (8 * T * E * E + 4 * T * T * E + 4 * T * E * mlp_dim)
    transcendentals = B * (head_num * T * T + T * mlp_dim)
    bytes_accessed = (2 * B * T * E * 4
                      + sum(int(w.size) * w.dtype.itemsize for w in weights))

    grid_spec = pltpu.PrefetchScalarGridSpec(
        num_scalar_prefetch=0,
        grid=(B, n_t),
        in_specs=[
            pl.BlockSpec((pl.Squeezed(), T, E), lambda b, t: (b, 0, 0)),  # x
            _const_spec(wq), _const_spec(wk), _const_spec(wv), _const_spec(wo),
            _const_spec(ln1g), _const_spec(ln1b),
            _const_spec(w1), _const_spec(b1), _const_spec(w2), _const_spec(b2),
            _const_spec(ln2g), _const_spec(ln2b),
        ],
        out_specs=pl.BlockSpec((pl.Squeezed(), tile_t, E),
                               lambda b, t: (b, t, 0)),
        scratch_shapes=[
            pltpu.VMEM((head_num, T, dh), jnp.bfloat16),   # K (per head)
            pltpu.VMEM((head_num, T, dh), jnp.bfloat16),   # V (per head)
        ],
    )

    return pl.pallas_call(
        partial(encoder_block_kernel, tile_t=tile_t),
        out_shape=jax.ShapeDtypeStruct((B, T, E), x.dtype),
        grid_spec=grid_spec,
        compiler_params=pltpu.CompilerParams(
            dimension_semantics=("parallel", "arbitrary"),
            vmem_limit_bytes=vmem_limit),
        cost_estimate=pl.CostEstimate(
            flops=int(flops), transcendentals=int(transcendentals),
            bytes_accessed=int(bytes_accessed)),
    )(x, *weights)


# ---------------------------- pure-JAX reference ------------------------------

def reference(x, params, head_num):
    B, T, E = x.shape
    dh = E // head_num
    dk = dh ** 0.5
    hi = jax.lax.Precision.HIGHEST

    qkv = jnp.einsum("bti,oi->bto", x, params["w_qkv"], precision=hi)
    qkv = qkv.reshape(B, T, dh, 3, head_num)                    # (d, k, h)
    q = jnp.transpose(qkv[:, :, :, 0, :], (0, 3, 1, 2))         # b h t d
    k = jnp.transpose(qkv[:, :, :, 1, :], (0, 3, 1, 2))
    v = jnp.transpose(qkv[:, :, :, 2, :], (0, 3, 1, 2))
    energy = jnp.einsum("bhid,bhjd->bhij", q, k, precision=hi) * dk
    attn = jax.nn.softmax(energy, axis=-1)
    o = jnp.einsum("bhij,bhjd->bhid", attn, v, precision=hi)
    o = jnp.transpose(o, (0, 2, 1, 3)).reshape(B, T, E)
    o = jnp.einsum("bti,oi->bto", o, params["w_out"], precision=hi)

    x1 = x + o
    ln = lambda y, g, b: ((y - y.mean(-1, keepdims=True))
                          / jnp.sqrt(y.var(-1, keepdims=True) + 1e-5) * g + b)
    x1 = ln(x1, params["ln1_g"], params["ln1_b"])
    h1 = jnp.einsum("bti,oi->bto", x1, params["w1"], precision=hi) + params["b1"]
    h1 = 0.5 * h1 * (1.0 + jax.scipy.special.erf(h1 / math.sqrt(2.0)))
    h2 = jnp.einsum("bti,oi->bto", h1, params["w2"], precision=hi) + params["b2"]
    x2 = x1 + h2
    return ln(x2, params["ln2_g"], params["ln2_b"])


# ----------------------------------- main -------------------------------------

def _make_params(key, E, H, MLP, *, qkv_s, out_s, w1_s, w2_s):
    ks = jax.random.split(key, 10)
    return {
        "w_qkv": qkv_s * jax.random.normal(ks[0], (3 * E, E), jnp.float32),
        "w_out": out_s * jax.random.normal(ks[1], (E, E), jnp.float32),
        "w1":    w1_s * jax.random.normal(ks[2], (MLP, E), jnp.float32),
        "b1":    0.05 * jax.random.normal(ks[3], (MLP,), jnp.float32),
        "w2":    w2_s * jax.random.normal(ks[4], (E, MLP), jnp.float32),
        "b2":    0.05 * jax.random.normal(ks[5], (E,), jnp.float32),
        "ln1_g": 1.0 + 0.1 * jax.random.normal(ks[6], (E,), jnp.float32),
        "ln1_b": 0.1 * jax.random.normal(ks[7], (E,), jnp.float32),
        "ln2_g": 1.0 + 0.1 * jax.random.normal(ks[8], (E,), jnp.float32),
        "ln2_b": 0.1 * jax.random.normal(ks[9], (E,), jnp.float32),
    }


if __name__ == "__main__":
    # Case 1: small shapes (primary check).
    B, T, E, H, MLP = 2, 8, 32, 4, 64
    params = _make_params(jax.random.PRNGKey(0), E, H, MLP,
                          qkv_s=0.08, out_s=0.08, w1_s=0.08, w2_s=0.08)
    x = jax.random.normal(jax.random.PRNGKey(1), (B, T, E), jnp.float32)
    out = jax.block_until_ready(transformer_encoder_block(x, params, H))
    ref = reference(x, params, H)
    assert out.shape == (B, T, E)
    # bf16 MXU operands vs f32 reference -> slightly looser tolerance.
    assert jnp.allclose(out, ref, rtol=2e-2, atol=2e-2), (
        f"small-case max abs diff {jnp.max(jnp.abs(out - ref))}")

    # Case 2: (8,128)-aligned shapes — exercises the token-tile grid axis
    # (n_t = 2), dh = 64 heads and the bf16 MXU path at realistic alignment.
    B2, T2, E2, H2, MLP2 = 2, 256, 256, 4, 512
    params2 = _make_params(jax.random.PRNGKey(2), E2, H2, MLP2,
                           qkv_s=0.01, out_s=0.02, w1_s=0.06, w2_s=0.04)
    x2 = jax.random.normal(jax.random.PRNGKey(3), (B2, T2, E2), jnp.float32)
    out2 = jax.block_until_ready(transformer_encoder_block(x2, params2, H2))
    ref2 = reference(x2, params2, H2)
    # End-to-end bf16-vs-f32 over six matmul stages: tolerance reflects bf16.
    assert jnp.allclose(out2, ref2, rtol=5e-2, atol=5e-2), (
        f"tiled-case max abs diff {jnp.max(jnp.abs(out2 - ref2))}")

    print("KERNEL_OK")
</pallas_src>

<mosaic_0001>
module attributes {stable_mosaic.version = 11 : i64} {
  func.func @encoder_block_kernel(%arg0: i32, %arg1: i32, %arg2: memref<1x8x32xf32, #tpu.memory_space<vmem>>, %arg3: memref<4x32x8xbf16, #tpu.memory_space<vmem>>, %arg4: memref<4x32x8xbf16, #tpu.memory_space<vmem>>, %arg5: memref<4x32x8xbf16, #tpu.memory_space<vmem>>, %arg6: memref<4x8x32xbf16, #tpu.memory_space<vmem>>, %arg7: memref<1x32xf32, #tpu.memory_space<vmem>>, %arg8: memref<1x32xf32, #tpu.memory_space<vmem>>, %arg9: memref<32x64xbf16, #tpu.memory_space<vmem>>, %arg10: memref<1x64xf32, #tpu.memory_space<vmem>>, %arg11: memref<64x32xbf16, #tpu.memory_space<vmem>>, %arg12: memref<1x32xf32, #tpu.memory_space<vmem>>, %arg13: memref<1x32xf32, #tpu.memory_space<vmem>>, %arg14: memref<1x32xf32, #tpu.memory_space<vmem>>, %arg15: memref<1x8x32xf32, #tpu.memory_space<vmem>>, %arg16: memref<4x8x8xbf16, #tpu.memory_space<vmem>>, %arg17: memref<4x8x8xbf16, #tpu.memory_space<vmem>>) attributes {dimension_semantics = [#tpu.dimension_semantics<parallel>, #tpu.dimension_semantics<arbitrary>], iteration_bounds = array<i64: 2, 1>, scalar_prefetch = 0 : i64, scratch_operands = 2 : i64, tpu.core_type = #tpu.core_type<tc>, window_params = [{transform_indices = @transform_0, window_bounds = array<i64: 1, 8, 32>}, {pipeline_mode = #tpu.pipeline_mode<synchronous>, transform_indices = @transform_1, window_bounds = array<i64: 4, 32, 8>}, {pipeline_mode = #tpu.pipeline_mode<synchronous>, transform_indices = @transform_2, window_bounds = array<i64: 4, 32, 8>}, {pipeline_mode = #tpu.pipeline_mode<synchronous>, transform_indices = @transform_3, window_bounds = array<i64: 4, 32, 8>}, {pipeline_mode = #tpu.pipeline_mode<synchronous>, transform_indices = @transform_4, window_bounds = array<i64: 4, 8, 32>}, {pipeline_mode = #tpu.pipeline_mode<synchronous>, transform_indices = @transform_5, window_bounds = array<i64: 1, 32>}, {pipeline_mode = #tpu.pipeline_mode<synchronous>, transform_indices = @transform_6, window_bounds = array<i64: 1, 32>}, {pipeline_mode = #tpu.pipeline_mode<synchronous>, transform_indices = @transform_7, window_bounds = array<i64: 32, 64>}, {pipeline_mode = #tpu.pipeline_mode<synchronous>, transform_indices = @transform_8, window_bounds = array<i64: 1, 64>}, {pipeline_mode = #tpu.pipeline_mode<synchronous>, transform_indices = @transform_9, window_bounds = array<i64: 64, 32>}, {pipeline_mode = #tpu.pipeline_mode<synchronous>, transform_indices = @transform_10, window_bounds = array<i64: 1, 32>}, {pipeline_mode = #tpu.pipeline_mode<synchronous>, transform_indices = @transform_11, window_bounds = array<i64: 1, 32>}, {pipeline_mode = #tpu.pipeline_mode<synchronous>, transform_indices = @transform_12, window_bounds = array<i64: 1, 32>}, {transform_indices = @transform_13, window_bounds = array<i64: 1, 8, 32>}]} {
    %c0_i32 = arith.constant 0 : i32
    %0 = arith.cmpi eq, %arg1, %c0_i32 : i32
    %1 = arith.extui %0 : i1 to i32
    %c0_i32_0 = arith.constant 0 : i32
    %2 = arith.cmpi ne, %1, %c0_i32_0 : i32
    scf.if %2 {
      %c0_67 = arith.constant 0 : index
      %c0_68 = arith.constant 0 : index
      %c0_69 = arith.constant 0 : index
      %140 = vector.load %arg2[%c0_67, %c0_68, %c0_69] : memref<1x8x32xf32, #tpu.memory_space<vmem>>, vector<1x8x32xf32>
      %141 = vector.shape_cast %140 : vector<1x8x32xf32> to vector<8x32xf32>
      %142 = arith.truncf %141 : vector<8x32xf32> to vector<8x32xbf16>
      %143 = vector.shape_cast %142 : vector<8x32xbf16> to vector<1x8x32xbf16>
      %144 = vector.shape_cast %143 : vector<1x8x32xbf16> to vector<1x8x32xbf16>
      %145 = vector.broadcast %144 : vector<1x8x32xbf16> to vector<4x8x32xbf16>
      %c0_70 = arith.constant 0 : index
      %c0_71 = arith.constant 0 : index
      %c0_72 = arith.constant 0 : index
      %146 = vector.load %arg4[%c0_70, %c0_71, %c0_72] : memref<4x32x8xbf16, #tpu.memory_space<vmem>>, vector<4x32x8xbf16>
      "tpu.trace_start"() <{level = 10 : i32, message = "hte,hed->htd"}> : () -> ()
      %cst_73 = arith.constant dense<0.000000e+00> : vector<4x8x8xf32>
      %147 = tpu.matmul %145, %146, %cst_73 {dimension_numbers = #tpu.dot_dimension_numbers<[2], [1], [1], [2], [0, 0, 0, 1, 1, 2], [0], [0]>} : vector<4x8x32xbf16>, vector<4x32x8xbf16>, vector<4x8x8xf32> -> vector<4x8x8xf32>
      "tpu.trace_stop"() : () -> ()
      %148 = arith.truncf %147 : vector<4x8x8xf32> to vector<4x8x8xbf16>
      %c0_74 = arith.constant 0 : index
      %c0_75 = arith.constant 0 : index
      %c0_76 = arith.constant 0 : index
      %149 = vector.load %arg16[%c0_74, %c0_75, %c0_76] : memref<4x8x8xbf16, #tpu.memory_space<vmem>>, vector<4x8x8xbf16>
      tpu.vector_store %arg16[%c0_74, %c0_75, %c0_76], %148 {strides = array<i32>} : memref<4x8x8xbf16, #tpu.memory_space<vmem>>, vector<4x8x8xbf16>,
      %c0_77 = arith.constant 0 : index
      %c0_78 = arith.constant 0 : index
      %c0_79 = arith.constant 0 : index
      %150 = vector.load %arg5[%c0_77, %c0_78, %c0_79] : memref<4x32x8xbf16, #tpu.memory_space<vmem>>, vector<4x32x8xbf16>
      "tpu.trace_start"() <{level = 10 : i32, message = "hte,hed->htd"}> : () -> ()
      %cst_80 = arith.constant dense<0.000000e+00> : vector<4x8x8xf32>
      %151 = tpu.matmul %145, %150, %cst_80 {dimension_numbers = #tpu.dot_dimension_numbers<[2], [1], [1], [2], [0, 0, 0, 1, 1, 2], [0], [0]>} : vector<4x8x32xbf16>, vector<4x32x8xbf16>, vector<4x8x8xf32> -> vector<4x8x8xf32>
      "tpu.trace_stop"() : () -> ()
      %152 = arith.truncf %151 : vector<4x8x8xf32> to vector<4x8x8xbf16>
      %c0_81 = arith.constant 0 : index
      %c0_82 = arith.constant 0 : index
      %c0_83 = arith.constant 0 : index
      %153 = vector.load %arg17[%c0_81, %c0_82, %c0_83] : memref<4x8x8xbf16, #tpu.memory_space<vmem>>, vector<4x8x8xbf16>
      tpu.vector_store %arg17[%c0_81, %c0_82, %c0_83], %152 {strides = array<i32>} : memref<4x8x8xbf16, #tpu.memory_space<vmem>>, vector<4x8x8xbf16>,
    } else {
    }
    %c8_i32 = arith.constant 8 : i32
    %3 = arith.muli %arg1, %c8_i32 : i32
    %4 = tpu.assume_multiple %3, 8 : i32
    %c0 = arith.constant 0 : index
    %5 = arith.index_cast %4 : i32 to index
    %c0_1 = arith.constant 0 : index
    %6 = vector.load %arg2[%c0, %5, %c0_1] : memref<1x8x32xf32, #tpu.memory_space<vmem>>, vector<1x8x32xf32>
    %7 = vector.shape_cast %6 : vector<1x8x32xf32> to vector<8x32xf32>
    %8 = arith.truncf %7 : vector<8x32xf32> to vector<8x32xbf16>
    %9 = vector.shape_cast %8 : vector<8x32xbf16> to vector<1x8x32xbf16>
    %10 = vector.shape_cast %9 : vector<1x8x32xbf16> to vector<1x8x32xbf16>
    %11 = vector.broadcast %10 : vector<1x8x32xbf16> to vector<4x8x32xbf16>
    %c0_2 = arith.constant 0 : index
    %c0_3 = arith.constant 0 : index
    %c0_4 = arith.constant 0 : index
    %12 = vector.load %arg3[%c0_2, %c0_3, %c0_4] : memref<4x32x8xbf16, #tpu.memory_space<vmem>>, vector<4x32x8xbf16>
    "tpu.trace_start"() <{level = 10 : i32, message = "hte,hed->htd"}> : () -> ()
    %cst = arith.constant dense<0.000000e+00> : vector<4x8x8xf32>
    %13 = tpu.matmul %11, %12, %cst {dimension_numbers = #tpu.dot_dimension_numbers<[2], [1], [1], [2], [0, 0, 0, 1, 1, 2], [0], [0]>} : vector<4x8x32xbf16>, vector<4x32x8xbf16>, vector<4x8x8xf32> -> vector<4x8x8xf32>
    "tpu.trace_stop"() : () -> ()
    %14 = arith.truncf %13 : vector<4x8x8xf32> to vector<4x8x8xbf16>
    %c0_5 = arith.constant 0 : index
    %c0_6 = arith.constant 0 : index
    %c0_7 = arith.constant 0 : index
    %15 = vector.load %arg16[%c0_5, %c0_6, %c0_7] : memref<4x8x8xbf16, #tpu.memory_space<vmem>>, vector<4x8x8xbf16>
    "tpu.trace_start"() <{level = 10 : i32, message = "hid,hjd->hij"}> : () -> ()
    %cst_8 = arith.constant dense<0.000000e+00> : vector<4x8x8xf32>
    %16 = tpu.matmul %14, %15, %cst_8 {dimension_numbers = #tpu.dot_dimension_numbers<[2], [2], [1], [1], [0, 0, 0, 1, 1, 1], [0], [0]>} : vector<4x8x8xbf16>, vector<4x8x8xbf16>, vector<4x8x8xf32> -> vector<4x8x8xf32>
    "tpu.trace_stop"() : () -> ()
    %cst_9 = arith.constant dense<0xFF800000> : vector<4x8xf32>
    %17 = vector.multi_reduction <maximumf>, %16, %cst_9 [2] : vector<4x8x8xf32> to vector<4x8xf32>
    %18 = vector.shape_cast %17 : vector<4x8xf32> to vector<4x8x1xf32>
    %19 = vector.broadcast %18 : vector<4x8x1xf32> to vector<4x8x8xf32>
    %20 = arith.subf %16, %19 : vector<4x8x8xf32>
    %21 = math.exp %20 : vector<4x8x8xf32>
    %cst_10 = arith.constant dense<0.000000e+00> : vector<4x8xf32>
    %22 = vector.multi_reduction <add>, %21, %cst_10 [2] : vector<4x8x8xf32> to vector<4x8xf32>
    %23 = vector.shape_cast %22 : vector<4x8xf32> to vector<4x8x1xf32>
    %24 = tpu.reciprocal %23 {approx = true} : vector<4x8x1xf32> -> vector<4x8x1xf32>
    %25 = vector.broadcast %24 : vector<4x8x1xf32> to vector<4x8x8xf32>
    %26 = arith.mulf %21, %25 : vector<4x8x8xf32>
    %27 = arith.truncf %26 : vector<4x8x8xf32> to vector<4x8x8xbf16>
    %c0_11 = arith.constant 0 : index
    %c0_12 = arith.constant 0 : index
    %c0_13 = arith.constant 0 : index
    %28 = vector.load %arg17[%c0_11, %c0_12, %c0_13] : memref<4x8x8xbf16, #tpu.memory_space<vmem>>, vector<4x8x8xbf16>
    "tpu.trace_start"() <{level = 10 : i32, message = "hij,hjd->hid"}> : () -> ()
    %cst_14 = arith.constant dense<0.000000e+00> : vector<4x8x8xf32>
    %29 = tpu.matmul %27, %28, %cst_14 {dimension_numbers = #tpu.dot_dimension_numbers<[2], [1], [1], [2], [0, 0, 0, 1, 1, 2], [0], [0]>} : vector<4x8x8xbf16>, vector<4x8x8xbf16>, vector<4x8x8xf32> -> vector<4x8x8xf32>
    "tpu.trace_stop"() : () -> ()
    %30 = arith.truncf %29 : vector<4x8x8xf32> to vector<4x8x8xbf16>
    %c0_15 = arith.constant 0 : index
    %c0_16 = arith.constant 0 : index
    %c0_17 = arith.constant 0 : index
    %31 = vector.load %arg6[%c0_15, %c0_16, %c0_17] : memref<4x8x32xbf16, #tpu.memory_space<vmem>>, vector<4x8x32xbf16>
    "tpu.trace_start"() <{level = 10 : i32, message = "htd,hde->hte"}> : () -> ()
    %cst_18 = arith.constant dense<0.000000e+00> : vector<4x8x32xf32>
    %32 = tpu.matmul %30, %31, %cst_18 {dimension_numbers = #tpu.dot_dimension_numbers<[2], [1], [1], [2], [0, 0, 0, 1, 1, 2], [0], [0]>} : vector<4x8x8xbf16>, vector<4x8x32xbf16>, vector<4x8x32xf32> -> vector<4x8x32xf32>
    "tpu.trace_stop"() : () -> ()
    %cst_19 = arith.constant dense<0.000000e+00> : vector<8x32xf32>
    %33 = vector.multi_reduction <add>, %32, %cst_19 [0] : vector<4x8x32xf32> to vector<8x32xf32>
    %34 = arith.addf %7, %33 : vector<8x32xf32>
    %c0_20 = arith.constant 0 : index
    %c0_21 = arith.constant 0 : index
    %35 = vector.load %arg7[%c0_20, %c0_21] : memref<1x32xf32, #tpu.memory_space<vmem>>, vector<1x32xf32>
    %c0_22 = arith.constant 0 : index
    %c0_23 = arith.constant 0 : index
    %36 = vector.load %arg8[%c0_22, %c0_23] : memref<1x32xf32, #tpu.memory_space<vmem>>, vector<1x32xf32>
    %cst_24 = arith.constant dense<0.000000e+00> : vector<8xf32>
    %37 = vector.multi_reduction <add>, %34, %cst_24 [1] : vector<8x32xf32> to vector<8xf32>
    %38 = vector.shape_cast %37 : vector<8xf32> to vector<8x1xf32>
    %cst_25 = arith.constant 3.200000e+01 : f32
    %39 = vector.broadcast %cst_25 : f32 to vector<8x1xf32>
    %40 = arith.divf %38, %39 : vector<8x1xf32>
    %41 = vector.broadcast %40 : vector<8x1xf32> to vector<8x32xf32>
    %42 = arith.subf %34, %41 : vector<8x32xf32>
    %43 = arith.mulf %42, %42 : vector<8x32xf32>
    %cst_26 = arith.constant dense<0.000000e+00> : vector<8xf32>
    %44 = vector.multi_reduction <add>, %43, %cst_26 [1] : vector<8x32xf32> to vector<8xf32>
    %45 = vector.shape_cast %44 : vector<8xf32> to vector<8x1xf32>
    %cst_27 = arith.constant 3.200000e+01 : f32
    %46 = vector.broadcast %cst_27 : f32 to vector<8x1xf32>
    %47 = arith.divf %45, %46 : vector<8x1xf32>
    %48 = vector.broadcast %40 : vector<8x1xf32> to vector<8x32xf32>
    %49 = arith.subf %34, %48 : vector<8x32xf32>
    %cst_28 = arith.constant 9.99999974E-6 : f32
    %50 = vector.broadcast %cst_28 : f32 to vector<8x1xf32>
    %51 = arith.addf %47, %50 : vector<8x1xf32>
    %52 = math.rsqrt %51 : vector<8x1xf32>
    %53 = vector.broadcast %52 : vector<8x1xf32> to vector<8x32xf32>
    %54 = arith.mulf %49, %53 : vector<8x32xf32>
    %55 = vector.broadcast %35 : vector<1x32xf32> to vector<8x32xf32>
    %56 = arith.mulf %54, %55 : vector<8x32xf32>
    %57 = vector.broadcast %36 : vector<1x32xf32> to vector<8x32xf32>
    %58 = arith.addf %56, %57 : vector<8x32xf32>
    %59 = arith.truncf %58 : vector<8x32xf32> to vector<8x32xbf16>
    %c0_29 = arith.constant 0 : index
    %c0_30 = arith.constant 0 : index
    %60 = vector.load %arg9[%c0_29, %c0_30] : memref<32x64xbf16, #tpu.memory_space<vmem>>, vector<32x64xbf16>
    %cst_31 = arith.constant dense<0.000000e+00> : vector<8x64xf32>
    %61 = tpu.matmul %59, %60, %cst_31 {dimension_numbers = #tpu.dot_dimension_numbers<[1], [0], [0], [1], [0, 0, 1, 1], [], []>} : vector<8x32xbf16>, vector<32x64xbf16>, vector<8x64xf32> -> vector<8x64xf32>
    %c0_32 = arith.constant 0 : index
    %c0_33 = arith.constant 0 : index
    %62 = vector.load %arg10[%c0_32, %c0_33] : memref<1x64xf32, #tpu.memory_space<vmem>>, vector<1x64xf32>
    %63 = vector.broadcast %62 : vector<1x64xf32> to vector<8x64xf32>
    %64 = arith.addf %61, %63 : vector<8x64xf32>
    %cst_34 = arith.constant 5.000000e-01 : f32
    %65 = vector.broadcast %cst_34 : f32 to vector<8x64xf32>
    %66 = arith.mulf %65, %64 : vector<8x64xf32>
    %cst_35 = arith.constant 0.707106769 : f32
    %67 = vector.broadcast %cst_35 : f32 to vector<8x64xf32>
    %68 = arith.mulf %64, %67 : vector<8x64xf32>
    %cst_36 = arith.constant 0.000000e+00 : f32
    %69 = vector.broadcast %cst_36 : f32 to vector<8x64xf32>
    %70 = arith.cmpf oge, %68, %69 : vector<8x64xf32>
    %cst_37 = arith.constant 1.000000e+00 : f32
    %cst_38 = arith.constant -1.000000e+00 : f32
    %71 = vector.broadcast %cst_37 : f32 to vector<8x64xf32>
    %72 = vector.broadcast %cst_38 : f32 to vector<8x64xf32>
    %73 = arith.select %70, %71, %72 : vector<8x64xi1>, vector<8x64xf32>
    %74 = math.absf %68 : vector<8x64xf32>
    %cst_39 = arith.constant 0.327591091 : f32
    %75 = vector.broadcast %cst_39 : f32 to vector<8x64xf32>
    %76 = arith.mulf %75, %74 : vector<8x64xf32>
    %cst_40 = arith.constant 1.000000e+00 : f32
    %77 = vector.broadcast %cst_40 : f32 to vector<8x64xf32>
    %78 = arith.addf %77, %76 : vector<8x64xf32>
    %cst_41 = arith.constant 1.000000e+00 : f32
    %79 = vector.broadcast %cst_41 : f32 to vector<8x64xf32>
    %80 = arith.divf %79, %78 : vector<8x64xf32>
    %cst_42 = arith.constant 1.06140542 : f32
    %81 = vector.broadcast %cst_42 : f32 to vector<8x64xf32>
    %82 = arith.mulf %81, %80 : vector<8x64xf32>
    %cst_43 = arith.constant -1.45315206 : f32
    %83 = vector.broadcast %cst_43 : f32 to vector<8x64xf32>
    %84 = arith.addf %82, %83 : vector<8x64xf32>
    %85 = arith.mulf %84, %80 : vector<8x64xf32>
    %cst_44 = arith.constant 1.42141378 : f32
    %86 = vector.broadcast %cst_44 : f32 to vector<8x64xf32>
    %87 = arith.addf %85, %86 : vector<8x64xf32>
    %88 = arith.mulf %87, %80 : vector<8x64xf32>
    %cst_45 = arith.constant -0.284496725 : f32
    %89 = vector.broadcast %cst_45 : f32 to vector<8x64xf32>
    %90 = arith.addf %88, %89 : vector<8x64xf32>
    %91 = arith.mulf %90, %80 : vector<8x64xf32>
    %cst_46 = arith.constant 0.254829586 : f32
    %92 = vector.broadcast %cst_46 : f32 to vector<8x64xf32>
    %93 = arith.addf %91, %92 : vector<8x64xf32>
    %94 = arith.mulf %93, %80 : vector<8x64xf32>
    %cst_47 = arith.constant 0.000000e+00 : f32
    %95 = vector.broadcast %cst_47 : f32 to vector<8x64xf32>
    %96 = arith.subf %95, %74 : vector<8x64xf32>
    %97 = arith.mulf %96, %74 : vector<8x64xf32>
    %98 = math.exp %97 : vector<8x64xf32>
    %99 = arith.mulf %94, %98 : vector<8x64xf32>
    %cst_48 = arith.constant 1.000000e+00 : f32
    %100 = vector.broadcast %cst_48 : f32 to vector<8x64xf32>
    %101 = arith.subf %100, %99 : vector<8x64xf32>
    %102 = arith.mulf %73, %101 : vector<8x64xf32>
    %cst_49 = arith.constant 1.000000e+00 : f32
    %103 = vector.broadcast %cst_49 : f32 to vector<8x64xf32>
    %104 = arith.addf %103, %102 : vector<8x64xf32>
    %105 = arith.mulf %66, %104 : vector<8x64xf32>
    %106 = arith.truncf %105 : vector<8x64xf32> to vector<8x64xbf16>
    %c0_50 = arith.constant 0 : index
    %c0_51 = arith.constant 0 : index
    %107 = vector.load %arg11[%c0_50, %c0_51] : memref<64x32xbf16, #tpu.memory_space<vmem>>, vector<64x32xbf16>
    %cst_52 = arith.constant dense<0.000000e+00> : vector<8x32xf32>
    %108 = tpu.matmul %106, %107, %cst_52 {dimension_numbers = #tpu.dot_dimension_numbers<[1], [0], [0], [1], [0, 0, 1, 1], [], []>} : vector<8x64xbf16>, vector<64x32xbf16>, vector<8x32xf32> -> vector<8x32xf32>
    %c0_53 = arith.constant 0 : index
    %c0_54 = arith.constant 0 : index
    %109 = vector.load %arg12[%c0_53, %c0_54] : memref<1x32xf32, #tpu.memory_space<vmem>>, vector<1x32xf32>
    %110 = vector.broadcast %109 : vector<1x32xf32> to vector<8x32xf32>
    %111 = arith.addf %108, %110 : vector<8x32xf32>
    %112 = arith.addf %58, %111 : vector<8x32xf32>
    %c0_55 = arith.constant 0 : index
    %c0_56 = arith.constant 0 : index
    %113 = vector.load %arg13[%c0_55, %c0_56] : memref<1x32xf32, #tpu.memory_space<vmem>>, vector<1x32xf32>
    %c0_57 = arith.constant 0 : index
    %c0_58 = arith.constant 0 : index
    %114 = vector.load %arg14[%c0_57, %c0_58] : memref<1x32xf32, #tpu.memory_space<vmem>>, vector<1x32xf32>
    %cst_59 = arith.constant dense<0.000000e+00> : vector<8xf32>
    %115 = vector.multi_reduction <add>, %112, %cst_59 [1] : vector<8x32xf32> to vector<8xf32>
    %116 = vector.shape_cast %115 : vector<8xf32> to vector<8x1xf32>
    %cst_60 = arith.constant 3.200000e+01 : f32
    %117 = vector.broadcast %cst_60 : f32 to vector<8x1xf32>
    %118 = arith.divf %116, %117 : vector<8x1xf32>
    %119 = vector.broadcast %118 : vector<8x1xf32> to vector<8x32xf32>
    %120 = arith.subf %112, %119 : vector<8x32xf32>
    %121 = arith.mulf %120, %120 : vector<8x32xf32>
    %cst_61 = arith.constant dense<0.000000e+00> : vector<8xf32>
    %122 = vector.multi_reduction <add>, %121, %cst_61 [1] : vector<8x32xf32> to vector<8xf32>
    %123 = vector.shape_cast %122 : vector<8xf32> to vector<8x1xf32>
    %cst_62 = arith.constant 3.200000e+01 : f32
    %124 = vector.broadcast %cst_62 : f32 to vector<8x1xf32>
    %125 = arith.divf %123, %124 : vector<8x1xf32>
    %126 = vector.broadcast %118 : vector<8x1xf32> to vector<8x32xf32>
    %127 = arith.subf %112, %126 : vector<8x32xf32>
    %cst_63 = arith.constant 9.99999974E-6 : f32
    %128 = vector.broadcast %cst_63 : f32 to vector<8x1xf32>
    %129 = arith.addf %125, %128 : vector<8x1xf32>
    %130 = math.rsqrt %129 : vector<8x1xf32>
    %131 = vector.broadcast %130 : vector<8x1xf32> to vector<8x32xf32>
    %132 = arith.mulf %127, %131 : vector<8x32xf32>
    %133 = vector.broadcast %113 : vector<1x32xf32> to vector<8x32xf32>
    %134 = arith.mulf %132, %133 : vector<8x32xf32>
    %135 = vector.broadcast %114 : vector<1x32xf32> to vector<8x32xf32>
    %136 = arith.addf %134, %135 : vector<8x32xf32>
    %c0_64 = arith.constant 0 : index
    %c0_65 = arith.constant 0 : index
    %c0_66 = arith.constant 0 : index
    %137 = vector.load %arg15[%c0_64, %c0_65, %c0_66] : memref<1x8x32xf32, #tpu.memory_space<vmem>>, vector<1x8x32xf32>
    %138 = vector.shape_cast %137 : vector<1x8x32xf32> to vector<8x32xf32>
    %139 = vector.shape_cast %136 : vector<8x32xf32> to vector<1x8x32xf32>
    tpu.vector_store %arg15[%c0_64, %c0_65, %c0_66], %139 {strides = array<i32>} : memref<1x8x32xf32, #tpu.memory_space<vmem>>, vector<1x8x32xf32>,
    return
  }
  func.func @transform_0(%arg0: i32, %arg1: i32) -> (i32, i32, i32) {
    %c0_i32 = arith.constant 0 : i32
    %c0_i32_0 = arith.constant 0 : i32
    %c0_i32_1 = arith.constant 0 : i32
    return %arg0, %c0_i32, %c0_i32_0 : i32, i32, i32
  }
  func.func @transform_1(%arg0: i32, %arg1: i32) -> (i32, i32, i32) {
    %c0_i32 = arith.constant 0 : i32
    %c0_i32_0 = arith.constant 0 : i32
    %c0_i32_1 = arith.constant 0 : i32
    %c0_i32_2 = arith.constant 0 : i32
    return %c0_i32, %c0_i32_0, %c0_i32_1 : i32, i32, i32
  }
  func.func @transform_2(%arg0: i32, %arg1: i32) -> (i32, i32, i32) {
    %c0_i32 = arith.constant 0 : i32
    %c0_i32_0 = arith.constant 0 : i32
    %c0_i32_1 = arith.constant 0 : i32
    %c0_i32_2 = arith.constant 0 : i32
    return %c0_i32, %c0_i32_0, %c0_i32_1 : i32, i32, i32
  }
  func.func @transform_3(%arg0: i32, %arg1: i32) -> (i32, i32, i32) {
    %c0_i32 = arith.constant 0 : i32
    %c0_i32_0 = arith.constant 0 : i32
    %c0_i32_1 = arith.constant 0 : i32
    %c0_i32_2 = arith.constant 0 : i32
    return %c0_i32, %c0_i32_0, %c0_i32_1 : i32, i32, i32
  }
  func.func @transform_4(%arg0: i32, %arg1: i32) -> (i32, i32, i32) {
    %c0_i32 = arith.constant 0 : i32
    %c0_i32_0 = arith.constant 0 : i32
    %c0_i32_1 = arith.constant 0 : i32
    %c0_i32_2 = arith.constant 0 : i32
    return %c0_i32, %c0_i32_0, %c0_i32_1 : i32, i32, i32
  }
  func.func @transform_5(%arg0: i32, %arg1: i32) -> (i32, i32) {
    %c0_i32 = arith.constant 0 : i32
    %c0_i32_0 = arith.constant 0 : i32
    %c0_i32_1 = arith.constant 0 : i32
    return %c0_i32, %c0_i32_0 : i32, i32
  }
  func.func @transform_6(%arg0: i32, %arg1: i32) -> (i32, i32) {
    %c0_i32 = arith.constant 0 : i32
    %c0_i32_0 = arith.constant 0 : i32
    %c0_i32_1 = arith.constant 0 : i32
    return %c0_i32, %c0_i32_0 : i32, i32
  }
  func.func @transform_7(%arg0: i32, %arg1: i32) -> (i32, i32) {
    %c0_i32 = arith.constant 0 : i32
    %c0_i32_0 = arith.constant 0 : i32
    %c0_i32_1 = arith.constant 0 : i32
    return %c0_i32, %c0_i32_0 : i32, i32
  }
  func.func @transform_8(%arg0: i32, %arg1: i32) -> (i32, i32) {
    %c0_i32 = arith.constant 0 : i32
    %c0_i32_0 = arith.constant 0 : i32
    %c0_i32_1 = arith.constant 0 : i32
    return %c0_i32, %c0_i32_0 : i32, i32
  }
  func.func @transform_9(%arg0: i32, %arg1: i32) -> (i32, i32) {
    %c0_i32 = arith.constant 0 : i32
    %c0_i32_0 = arith.constant 0 : i32
    %c0_i32_1 = arith.constant 0 : i32
    return %c0_i32, %c0_i32_0 : i32, i32
  }
  func.func @transform_10(%arg0: i32, %arg1: i32) -> (i32, i32) {
    %c0_i32 = arith.constant 0 : i32
    %c0_i32_0 = arith.constant 0 : i32
    %c0_i32_1 = arith.constant 0 : i32
    return %c0_i32, %c0_i32_0 : i32, i32
  }
  func.func @transform_11(%arg0: i32, %arg1: i32) -> (i32, i32) {
    %c0_i32 = arith.constant 0 : i32
    %c0_i32_0 = arith.constant 0 : i32
    %c0_i32_1 = arith.constant 0 : i32
    return %c0_i32, %c0_i32_0 : i32, i32
  }
  func.func @transform_12(%arg0: i32, %arg1: i32) -> (i32, i32) {
    %c0_i32 = arith.constant 0 : i32
    %c0_i32_0 = arith.constant 0 : i32
    %c0_i32_1 = arith.constant 0 : i32
    return %c0_i32, %c0_i32_0 : i32, i32
  }
  func.func @transform_13(%arg0: i32, %arg1: i32) -> (i32, i32, i32) {
    %c0_i32 = arith.constant 0 : i32
    %c0_i32_0 = arith.constant 0 : i32
    return %arg0, %arg1, %c0_i32 : i32, i32, i32
  }
}

</mosaic_0001>

<llo_original>
// kernel: tpu_custom_call.1
$region0: #{tpu_custom_call.1}
  #allocation0 [shape = 'u32[]', space=smem, size = 0x4, offset = 0x4, fixed_abs, tag = 'smem constant byte address 0x4 - core index']
  #allocation1 [shape = 'u32[72,128]{1,0:T(1,128)}', space=vmem, size = 0x9000, scoped, tag = 'internal scratch']
  #allocation2 [shape = 'bf16[4,8,8]{2,1,0:T(8,128)(2,1)}', space=vmem, size = 0x2000, scoped, tag = 'scratch operand']
  #allocation3 [shape = 'bf16[4,8,8]{2,1,0:T(8,128)(2,1)}', space=vmem, size = 0x2000, scoped, tag = 'scratch operand']
  %s0 = inlined_call_operand.vmem [shape: f32[2,8,32], index: 0, kind: input, shape index: {}]
  %s1 = inlined_call_operand.vmem [shape: bf16[4,32,8], index: 1, kind: input, shape index: {}]
  %s2 = inlined_call_operand.vmem [shape: bf16[4,32,8], index: 2, kind: input, shape index: {}]
  %s3 = inlined_call_operand.vmem [shape: bf16[4,32,8], index: 3, kind: input, shape index: {}]
  %s4 = inlined_call_operand.vmem [shape: bf16[4,8,32], index: 4, kind: input, shape index: {}]
  %s5 = inlined_call_operand.vmem [shape: f32[1,32], index: 5, kind: input, shape index: {}]
  %s6 = inlined_call_operand.vmem [shape: f32[1,32], index: 6, kind: input, shape index: {}]
  %s7 = inlined_call_operand.vmem [shape: bf16[32,64], index: 7, kind: input, shape index: {}]
  %s8 = inlined_call_operand.vmem [shape: f32[1,64], index: 8, kind: input, shape index: {}]
  %s9 = inlined_call_operand.vmem [shape: bf16[64,32], index: 9, kind: input, shape index: {}]
  %s10 = inlined_call_operand.vmem [shape: f32[1,32], index: 10, kind: input, shape index: {}]
  %s11 = inlined_call_operand.vmem [shape: f32[1,32], index: 11, kind: input, shape index: {}]
  %s12 = inlined_call_operand.vmem [shape: f32[1,32], index: 12, kind: input, shape index: {}]
  %s13 = inlined_call_operand.hbm [shape: f32[2,8,32], index: 13, kind: output, shape index: {}]
  %s14 = sld [smem:[#allocation0]]
  $region89: #{tpu_custom_call.1} parent=0
    _
  %s16 = ssub.s32 1, %s14
  %s17 = scalar_select 0, %s16, %s14
  $region1: #{tpu_custom_call.1} parent=0
    #allocation4 [shape = 'u8[8192]{0}', space=vmem, size = 0x2000, scoped, tag = 'output window, operand 0']
    #allocation5 [shape = 's32[2]{0}', space=sflag, size = 0x8, scoped, tag = 'scoped memory for tpu_custom_call.1']
    %18 = vsyncpa [#allocation5], 0
    %s19 = scalar_lea.sflag [#allocation5], 1
    %20 = vsyncpa %s19, 0
    loop: start=0, step=1, limit=4
    $region2: #{tpu_custom_call.1} parent=1 // loop_pre_header
      _
    $region3: #{tpu_custom_call.1} parent=1 // loop_header
      %s22 = sphi 0, %s26
      %p23 = scmp.ge.s32.totalorder %s22, 4
      %s29 = sphi 0, %s41
      %s30 = sphi 0, %s37
      %s31 = sphi 0, %s29
      %s32 = sphi 0, %s30
      %s33 = sphi 0, %s31
      %s34 = sphi 0, %s32
      %s44 = sphi 0, %s46
      %s47 = sphi 0, %s44
      %s48 = sphi 0, %s47
      %s64 = sphi 0, %s48
      %s68 = sphi 0, %s68
      %s70 = sphi 0, %s68
      %s71 = sphi 0, %s70
      %s85 = sphi 0, %s71
      %s89 = sphi 0, %s89
      %s91 = sphi 0, %s89
      %s92 = sphi 0, %s91
      %s106 = sphi 0, %s92
      %s110 = sphi 0, %s110
      %s112 = sphi 0, %s110
      %s113 = sphi 0, %s112
      %s127 = sphi 0, %s113
      %s131 = sphi 0, %s131
      %s133 = sphi 0, %s131
      %s134 = sphi 0, %s133
      %s148 = sphi 0, %s134
      %s152 = sphi 0, %s152
      %s154 = sphi 0, %s152
      %s155 = sphi 0, %s154
      %s169 = sphi 0, %s155
      %s173 = sphi 0, %s173
      %s175 = sphi 0, %s173
      %s176 = sphi 0, %s175
      %s190 = sphi 0, %s176
      %s194 = sphi 0, %s194
      %s196 = sphi 0, %s194
      %s197 = sphi 0, %s196
      %s211 = sphi 0, %s197
      %s215 = sphi 0, %s215
      %s217 = sphi 0, %s215
      %s218 = sphi 0, %s217
      %s232 = sphi 0, %s218
      %s236 = sphi 0, %s236
      %s238 = sphi 0, %s236
      %s239 = sphi 0, %s238
      %s253 = sphi 0, %s239
      %s257 = sphi 0, %s257
      %s259 = sphi 0, %s257
      %s260 = sphi 0, %s259
      %s274 = sphi 0, %s260
      %s278 = sphi 0, %s278
      %s280 = sphi 0, %s278
      %s281 = sphi 0, %s280
      %s295 = sphi 0, %s281
      %s299 = sphi 0, %s299
      %s301 = sphi 0, %s299
      %s302 = sphi 0, %s301
      %s316 = sphi 0, %s302
      %s324 = sphi 0, %s326
      %s327 = sphi 0, %s324
      %s328 = sphi 0, %s327
      %s344 = sphi 0, %s328
    $region4: #{tpu_custom_call.1} parent=1 // loop_header_branch
      %25 = sbr.rel (%p23) target = $region8
    $region5: #{tpu_custom_call.1} parent=1 // loop_body
      %s27 = ssub.s32 %s22, 1
      %s28 = ssub.s32 %s22, 2
      %s35 = sadd.s32 1, %s30
      %p36 = scmp.ge.s32.totalorder %s35, 1
      %s37 = scalar_select %p36, 0, %s35
      %s38 = sadd.s32 1, %s29
      %s39 = scalar_select %p36, %s38, %s29
      %p40 = scmp.ge.s32.totalorder %s39, 2
      %s41 = scalar_select %p40, 0, %s39
      %s42 = ssub.s32 %s29, %s41
      %p43 = scmp.eq.s32.totalorder %s42, 0
      %s45 = sadd.s32 %s44, 1
      %s46 = scalar_select %p43, %s44, %s45
      %p49 = pneg %p43
      %p50 = scmp.eq.s32.totalorder %s22, 1
      %p51 = por %p49, %p50
      %p52 = scmp.ne.s32.totalorder %s44, %s47
      %p53 = scmp.eq.s32.totalorder %s22, 0
      %p54 = por %p52, %p53
      %p55 = scmp.ne.s32.totalorder %s44, %s47
      %p56 = scmp.eq.s32.totalorder %s27, 1
      %p57 = por %p55, %p56
      %p58 = scmp.ne.s32.totalorder %s47, %s48
      %p59 = scmp.eq.s32.totalorder %s27, 0
      %p60 = por %p58, %p59
      %p61 = scmp.ne.s32.totalorder %s47, %s48
      %p62 = scmp.eq.s32.totalorder %s28, 1
      %p63 = por %p61, %p62
      %p65 = scmp.ne.s32.totalorder %s48, %s64
      %p66 = scmp.eq.s32.totalorder %s28, 0
      %p67 = por %p65, %p66
      %s69 = sadd.s32 %s68, 1
      %p72 = scmp.eq.s32.totalorder %s22, 1
      %p73 = scmp.ne.s32.totalorder %s68, %s70
      %p74 = scmp.eq.s32.totalorder %s22, 0
      %p75 = por %p73, %p74
      %p76 = scmp.ne.s32.totalorder %s68, %s70
      %p77 = scmp.eq.s32.totalorder %s27, 1
      %p78 = por %p76, %p77
      %p79 = scmp.ne.s32.totalorder %s70, %s71
      %p80 = scmp.eq.s32.totalorder %s27, 0
      %p81 = por %p79, %p80
      %p82 = scmp.ne.s32.totalorder %s70, %s71
      %p83 = scmp.eq.s32.totalorder %s28, 1
      %p84 = por %p82, %p83
      %p86 = scmp.ne.s32.totalorder %s71, %s85
      %p87 = scmp.eq.s32.totalorder %s28, 0
      %p88 = por %p86, %p87
      %s90 = sadd.s32 %s89, 1
      %p93 = scmp.eq.s32.totalorder %s22, 1
      %p94 = scmp.ne.s32.totalorder %s89, %s91
      %p95 = scmp.eq.s32.totalorder %s22, 0
      %p96 = por %p94, %p95
      %p97 = scmp.ne.s32.totalorder %s89, %s91
      %p98 = scmp.eq.s32.totalorder %s27, 1
      %p99 = por %p97, %p98
      %p100 = scmp.ne.s32.totalorder %s91, %s92
      %p101 = scmp.eq.s32.totalorder %s27, 0
      %p102 = por %p100, %p101
      %p103 = scmp.ne.s32.totalorder %s91, %s92
      %p104 = scmp.eq.s32.totalorder %s28, 1
      %p105 = por %p103, %p104
      %p107 = scmp.ne.s32.totalorder %s92, %s106
      %p108 = scmp.eq.s32.totalorder %s28, 0
      %p109 = por %p107, %p108
      %s111 = sadd.s32 %s110, 1
      %p114 = scmp.eq.s32.totalorder %s22, 1
      %p115 = scmp.ne.s32.totalorder %s110, %s112
      %p116 = scmp.eq.s32.totalorder %s22, 0
      %p117 = por %p115, %p116
      %p118 = scmp.ne.s32.totalorder %s110, %s112
      %p119 = scmp.eq.s32.totalorder %s27, 1
      %p120 = por %p118, %p119
      %p121 = scmp.ne.s32.totalorder %s112, %s113
      %p122 = scmp.eq.s32.totalorder %s27, 0
      %p123 = por %p121, %p122
      %p124 = scmp.ne.s32.totalorder %s112, %s113
      %p125 = scmp.eq.s32.totalorder %s28, 1
      %p126 = por %p124, %p125
      %p128 = scmp.ne.s32.totalorder %s113, %s127
      %p129 = scmp.eq.s32.totalorder %s28, 0
      %p130 = por %p128, %p129
      %s132 = sadd.s32 %s131, 1
      %p135 = scmp.eq.s32.totalorder %s22, 1
      %p136 = scmp.ne.s32.totalorder %s131, %s133
      %p137 = scmp.eq.s32.totalorder %s22, 0
      %p138 = por %p136, %p137
      %p139 = scmp.ne.s32.totalorder %s131, %s133
      %p140 = scmp.eq.s32.totalorder %s27, 1
      %p141 = por %p139, %p140
      %p142 = scmp.ne.s32.totalorder %s133, %s134
      %p143 = scmp.eq.s32.totalorder %s27, 0
      %p144 = por %p142, %p143
      %p145 = scmp.ne.s32.totalorder %s133, %s134
      %p146 = scmp.eq.s32.totalorder %s28, 1
      %p147 = por %p145, %p146
      %p149 = scmp.ne.s32.totalorder %s134, %s148
      %p150 = scmp.eq.s32.totalorder %s28, 0
      %p151 = por %p149, %p150
      %s153 = sadd.s32 %s152, 1
      %p156 = scmp.eq.s32.totalorder %s22, 1
      %p157 = scmp.ne.s32.totalorder %s152, %s154
      %p158 = scmp.eq.s32.totalorder %s22, 0
      %p159 = por %p157, %p158
      %p160 = scmp.ne.s32.totalorder %s152, %s154
      %p161 = scmp.eq.s32.totalorder %s27, 1
      %p162 = por %p160, %p161
      %p163 = scmp.ne.s32.totalorder %s154, %s155
      %p164 = scmp.eq.s32.totalorder %s27, 0
      %p165 = por %p163, %p164
      %p166 = scmp.ne.s32.totalorder %s154, %s155
      %p167 = scmp.eq.s32.totalorder %s28, 1
      %p168 = por %p166, %p167
      %p170 = scmp.ne.s32.totalorder %s155, %s169
      %p171 = scmp.eq.s32.totalorder %s28, 0
      %p172 = por %p170, %p171
      %s174 = sadd.s32 %s173, 1
      %p177 = scmp.eq.s32.totalorder %s22, 1
      %p178 = scmp.ne.s32.totalorder %s173, %s175
      %p179 = scmp.eq.s32.totalorder %s22, 0
      %p180 = por %p178, %p179
      %p181 = scmp.ne.s32.totalorder %s173, %s175
      %p182 = scmp.eq.s32.totalorder %s27, 1
      %p183 = por %p181, %p182
      %p184 = scmp.ne.s32.totalorder %s175, %s176
      %p185 = scmp.eq.s32.totalorder %s27, 0
      %p186 = por %p184, %p185
      %p187 = scmp.ne.s32.totalorder %s175, %s176
      %p188 = scmp.eq.s32.totalorder %s28, 1
      %p189 = por %p187, %p188
      %p191 = scmp.ne.s32.totalorder %s176, %s190
      %p192 = scmp.eq.s32.totalorder %s28, 0
      %p193 = por %p191, %p192
      %s195 = sadd.s32 %s194, 1
      %p198 = scmp.eq.s32.totalorder %s22, 1
      %p199 = scmp.ne.s32.totalorder %s194, %s196
      %p200 = scmp.eq.s32.totalorder %s22, 0
      %p201 = por %p199, %p200
      %p202 = scmp.ne.s32.totalorder %s194, %s196
      %p203 = scmp.eq.s32.totalorder %s27, 1
      %p204 = por %p202, %p203
      %p205 = scmp.ne.s32.totalorder %s196, %s197
      %p206 = scmp.eq.s32.totalorder %s27, 0
      %p207 = por %p205, %p206
      %p208 = scmp.ne.s32.totalorder %s196, %s197
      %p209 = scmp.eq.s32.totalorder %s28, 1
      %p210 = por %p208, %p209
      %p212 = scmp.ne.s32.totalorder %s197, %s211
      %p213 = scmp.eq.s32.totalorder %s28, 0
      %p214 = por %p212, %p213
      %s216 = sadd.s32 %s215, 1
      %p219 = scmp.eq.s32.totalorder %s22, 1
      %p220 = scmp.ne.s32.totalorder %s215, %s217
      %p221 = scmp.eq.s32.totalorder %s22, 0
      %p222 = por %p220, %p221
      %p223 = scmp.ne.s32.totalorder %s215, %s217
      %p224 = scmp.eq.s32.totalorder %s27, 1
      %p225 = por %p223, %p224
      %p226 = scmp.ne.s32.totalorder %s217, %s218
      %p227 = scmp.eq.s32.totalorder %s27, 0
      %p228 = por %p226, %p227
      %p229 = scmp.ne.s32.totalorder %s217, %s218
      %p230 = scmp.eq.s32.totalorder %s28, 1
      %p231 = por %p229, %p230
      %p233 = scmp.ne.s32.totalorder %s218, %s232
      %p234 = scmp.eq.s32.totalorder %s28, 0
      %p235 = por %p233, %p234
      %s237 = sadd.s32 %s236, 1
      %p240 = scmp.eq.s32.totalorder %s22, 1
      %p241 = scmp.ne.s32.totalorder %s236, %s238
      %p242 = scmp.eq.s32.totalorder %s22, 0
      %p243 = por %p241, %p242
      %p244 = scmp.ne.s32.totalorder %s236, %s238
      %p245 = scmp.eq.s32.totalorder %s27, 1
      %p246 = por %p244, %p245
      %p247 = scmp.ne.s32.totalorder %s238, %s239
      %p248 = scmp.eq.s32.totalorder %s27, 0
      %p249 = por %p247, %p248
      %p250 = scmp.ne.s32.totalorder %s238, %s239
      %p251 = scmp.eq.s32.totalorder %s28, 1
      %p252 = por %p250, %p251
      %p254 = scmp.ne.s32.totalorder %s239, %s253
      %p255 = scmp.eq.s32.totalorder %s28, 0
      %p256 = por %p254, %p255
      %s258 = sadd.s32 %s257, 1
      %p261 = scmp.eq.s32.totalorder %s22, 1
      %p262 = scmp.ne.s32.totalorder %s257, %s259
      %p263 = scmp.eq.s32.totalorder %s22, 0
      %p264 = por %p262, %p263
      %p265 = scmp.ne.s32.totalorder %s257, %s259
      %p266 = scmp.eq.s32.totalorder %s27, 1
      %p267 = por %p265, %p266
      %p268 = scmp.ne.s32.totalorder %s259, %s260
      %p269 = scmp.eq.s32.totalorder %s27, 0
      %p270 = por %p268, %p269
      %p271 = scmp.ne.s32.totalorder %s259, %s260
      %p272 = scmp.eq.s32.totalorder %s28, 1
      %p273 = por %p271, %p272
      %p275 = scmp.ne.s32.totalorder %s260, %s274
      %p276 = scmp.eq.s32.totalorder %s28, 0
      %p277 = por %p275, %p276
      %s279 = sadd.s32 %s278, 1
      %p282 = scmp.eq.s32.totalorder %s22, 1
      %p283 = scmp.ne.s32.totalorder %s278, %s280
      %p284 = scmp.eq.s32.totalorder %s22, 0
      %p285 = por %p283, %p284
      %p286 = scmp.ne.s32.totalorder %s278, %s280
      %p287 = scmp.eq.s32.totalorder %s27, 1
      %p288 = por %p286, %p287
      %p289 = scmp.ne.s32.totalorder %s280, %s281
      %p290 = scmp.eq.s32.totalorder %s27, 0
      %p291 = por %p289, %p290
      %p292 = scmp.ne.s32.totalorder %s280, %s281
      %p293 = scmp.eq.s32.totalorder %s28, 1
      %p294 = por %p292, %p293
      %p296 = scmp.ne.s32.totalorder %s281, %s295
      %p297 = scmp.eq.s32.totalorder %s28, 0
      %p298 = por %p296, %p297
      %s300 = sadd.s32 %s299, 1
      %p303 = scmp.eq.s32.totalorder %s22, 1
      %p304 = scmp.ne.s32.totalorder %s299, %s301
      %p305 = scmp.eq.s32.totalorder %s22, 0
      %p306 = por %p304, %p305
      %p307 = scmp.ne.s32.totalorder %s299, %s301
      %p308 = scmp.eq.s32.totalorder %s27, 1
      %p309 = por %p307, %p308
      %p310 = scmp.ne.s32.totalorder %s301, %s302
      %p311 = scmp.eq.s32.totalorder %s27, 0
      %p312 = por %p310, %p311
      %p313 = scmp.ne.s32.totalorder %s301, %s302
      %p314 = scmp.eq.s32.totalorder %s28, 1
      %p315 = por %p313, %p314
      %p317 = scmp.ne.s32.totalorder %s302, %s316
      %p318 = scmp.eq.s32.totalorder %s28, 0
      %p319 = por %p317, %p318
      %s320 = ssub.s32 %s29, %s41
      %s321 = ssub.s32 %s30, %s37
      %s322 = sor.u32 %s320, %s321
      %p323 = scmp.eq.s32.totalorder %s322, 0
      %s325 = sadd.s32 %s324, 1
      %s326 = scalar_select %p323, %s324, %s325
      %p329 = pneg %p323
      %p330 = scmp.eq.s32.totalorder %s22, 1
      %p331 = por %p329, %p330
      %p332 = scmp.ne.s32.totalorder %s324, %s327
      %p333 = scmp.eq.s32.totalorder %s22, 0
      %p334 = por %p332, %p333
      %p335 = scmp.ne.s32.totalorder %s324, %s327
      %p336 = scmp.eq.s32.totalorder %s27, 1
      %p337 = por %p335, %p336
      %p338 = scmp.ne.s32.totalorder %s327, %s328
      %p339 = scmp.eq.s32.totalorder %s27, 0
      %p340 = por %p338, %p339
      %p341 = scmp.ne.s32.totalorder %s327, %s328
      %p342 = scmp.eq.s32.totalorder %s28, 1
      %p343 = por %p341, %p342
      %p345 = scmp.ne.s32.totalorder %s328, %s344
      %p346 = scmp.eq.s32.totalorder %s28, 0
      %p347 = por %p345, %p346
      %p348 = scmp.le.s32.totalorder 1, %s22
      %p349 = scmp.lt.s32.totalorder %s22, 3
      %p350 = pnand %p348, %p349
      %p351 = pneg %p350
      // Predicated region
      $region9: #{tpu_custom_call.1} parent=5 // pred_check
        _
      $region10: #{tpu_custom_call.1} parent=5 // pred_check_branch
        %353 = sbr.rel (%p350) target = $region12
      $region11: #{tpu_custom_call.1} parent=5 // pred_region
        %s354 = ssub.s32 %s22, 1
        // Predicated region
        $region13: #{tpu_custom_call.1} parent=11 // pred_check
          %p355 = pneg %p81
        $region14: #{tpu_custom_call.1} parent=11 // pred_check_branch
          %357 = sbr.rel (%p355) target = $region16
        $region15: #{tpu_custom_call.1} parent=11 // pred_region
          _
        $region16: #{tpu_custom_call.1} parent=11 // pred_fallthru
          _
        // Predicated region
        $region17: #{tpu_custom_call.1} parent=11 // pred_check
          %p358 = pneg %p102
        $region18: #{tpu_custom_call.1} parent=11 // pred_check_branch
          %360 = sbr.rel (%p358) target = $region20
        $region19: #{tpu_custom_call.1} parent=11 // pred_region
          _
        $region20: #{tpu_custom_call.1} parent=11 // pred_fallthru
          _
        // Predicated region
        $region21: #{tpu_custom_call.1} parent=11 // pred_check
          %p361 = pneg %p123
        $region22: #{tpu_custom_call.1} parent=11 // pred_check_branch
          %363 = sbr.rel (%p361) target = $region24
        $region23: #{tpu_custom_call.1} parent=11 // pred_region
          _
        $region24: #{tpu_custom_call.1} parent=11 // pred_fallthru
          _
        // Predicated region
        $region25: #{tpu_custom_call.1} parent=11 // pred_check
          %p364 = pneg %p144
        $region26: #{tpu_custom_call.1} parent=11 // pred_check_branch
          %366 = sbr.rel (%p364) target = $region28
        $region27: #{tpu_custom_call.1} parent=11 // pred_region
          _
        $region28: #{tpu_custom_call.1} parent=11 // pred_fallthru
          _
        // Predicated region
        $region29: #{tpu_custom_call.1} parent=11 // pred_check
          %p367 = pneg %p165
        $region30: #{tpu_custom_call.1} parent=11 // pred_check_branch
          %369 = sbr.rel (%p367) target = $region32
        $region31: #{tpu_custom_call.1} parent=11 // pred_region
          _
        $region32: #{tpu_custom_call.1} parent=11 // pred_fallthru
          _
        // Predicated region
        $region33: #{tpu_custom_call.1} parent=11 // pred_check
          %p370 = pneg %p186
        $region34: #{tpu_custom_call.1} parent=11 // pred_check_branch
          %372 = sbr.rel (%p370) target = $region36
        $region35: #{tpu_custom_call.1} parent=11 // pred_region
          _
        $region36: #{tpu_custom_call.1} parent=11 // pred_fallthru
          _
        // Predicated region
        $region37: #{tpu_custom_call.1} parent=11 // pred_check
          %p373 = pneg %p207
        $region38: #{tpu_custom_call.1} parent=11 // pred_check_branch
          %375 = sbr.rel (%p373) target = $region40
        $region39: #{tpu_custom_call.1} parent=11 // pred_region
          _
        $region40: #{tpu_custom_call.1} parent=11 // pred_fallthru
          _
        // Predicated region
        $region41: #{tpu_custom_call.1} parent=11 // pred_check
          %p376 = pneg %p228
        $region42: #{tpu_custom_call.1} parent=11 // pred_check_branch
          %378 = sbr.rel (%p376) target = $region44
        $region43: #{tpu_custom_call.1} parent=11 // pred_region
          _
        $region44: #{tpu_custom_call.1} parent=11 // pred_fallthru
          _
        // Predicated region
        $region45: #{tpu_custom_call.1} parent=11 // pred_check
          %p379 = pneg %p249
        $region46: #{tpu_custom_call.1} parent=11 // pred_check_branch
          %381 = sbr.rel (%p379) target = $region48
        $region47: #{tpu_custom_call.1} parent=11 // pred_region
          _
        $region48: #{tpu_custom_call.1} parent=11 // pred_fallthru
          _
        // Predicated region
        $region49: #{tpu_custom_call.1} parent=11 // pred_check
          %p382 = pneg %p270
        $region50: #{tpu_custom_call.1} parent=11 // pred_check_branch
          %384 = sbr.rel (%p382) target = $region52
        $region51: #{tpu_custom_call.1} parent=11 // pred_region
          _
        $region52: #{tpu_custom_call.1} parent=11 // pred_fallthru
          _
        // Predicated region
        $region53: #{tpu_custom_call.1} parent=11 // pred_check
          %p385 = pneg %p291
        $region54: #{tpu_custom_call.1} parent=11 // pred_check_branch
          %387 = sbr.rel (%p385) target = $region56
        $region55: #{tpu_custom_call.1} parent=11 // pred_region
          _
        $region56: #{tpu_custom_call.1} parent=11 // pred_fallthru
          _
        // Predicated region
        $region57: #{tpu_custom_call.1} parent=11 // pred_check
          %p388 = pneg %p312
        $region58: #{tpu_custom_call.1} parent=11 // pred_check_branch
          %390 = sbr.rel (%p388) target = $region60
        $region59: #{tpu_custom_call.1} parent=11 // pred_region
          _
        $region60: #{tpu_custom_call.1} parent=11 // pred_fallthru
          _
      $region12: #{tpu_custom_call.1} parent=5 // pred_fallthru
        _
      %p391 = scmp.lt.s32.totalorder %s22, 2
      // Predicated region
      $region61: #{tpu_custom_call.1} parent=5 // pred_check
        %p392 = pneg %p391
      $region62: #{tpu_custom_call.1} parent=5 // pred_check_branch
        %394 = sbr.rel (%p392) target = $region64
      $region63: #{tpu_custom_call.1} parent=5 // pred_region
        // Predicated region
        $region65: #{tpu_custom_call.1} parent=63 // pred_check
          %p395 = pneg %p54
        $region66: #{tpu_custom_call.1} parent=63 // pred_check_branch
          %397 = sbr.rel (%p395) target = $region68
        $region67: #{tpu_custom_call.1} parent=63 // pred_region
          %p398 = scmp.lt.s32.totalorder %s29, 1
          %s399 = scalar_select %p398, %s29, 1
          %s400 = smul.addr %s399, 8
          %s401 = scalar_lea.vmem %s0, %s400
        $region68: #{tpu_custom_call.1} parent=63 // pred_fallthru
          _
      $region64: #{tpu_custom_call.1} parent=5 // pred_fallthru
        _
      %p402 = scmp.le.s32.totalorder 1, %s22
      %p403 = scmp.lt.s32.totalorder %s22, 3
      %p404 = pnand %p402, %p403
      %p405 = pneg %p404
      // Predicated region
      $region69: #{tpu_custom_call.1} parent=5 // pred_check
        _
      $region70: #{tpu_custom_call.1} parent=5 // pred_check_branch
        %407 = sbr.rel (%p404) target = $region72
      $region71: #{tpu_custom_call.1} parent=5 // pred_region
        %s408 = ssub.s32 %s22, 1
        %p409 = scmp.lt.s32.totalorder %s31, 1
        %s410 = scalar_select %p409, %s31, 1
        %s411 = smul.addr %s410, 8
        %s412 = scalar_lea.vmem %s0, %s411
        %p413 = pneg %p60
        %p414 = pneg %p57
        %p415 = pneg %p81
        %p416 = pneg %p78
        %p417 = pneg %p102
        %p418 = pneg %p99
        %p419 = pneg %p123
        %p420 = pneg %p120
        %p421 = pneg %p144
        %p422 = pneg %p141
        %p423 = pneg %p165
        %p424 = pneg %p162
        %p425 = pneg %p186
        %p426 = pneg %p183
        %p427 = pneg %p207
        %p428 = pneg %p204
        %p429 = pneg %p228
        %p430 = pneg %p225
        %p431 = pneg %p249
        %p432 = pneg %p246
        %p433 = pneg %p270
        %p434 = pneg %p267
        %p435 = pneg %p291
        %p436 = pneg %p288
        %p437 = pneg %p312
        %p438 = pneg %p309
        %p439 = pneg %p340
        %p440 = pneg %p337
        %s441 = sand.u32 %s327, 1
        %s442 = scalar_lea.sflag [#allocation5], %s441
        %s443 = sand.u32 %s327, 1
        %s444 = smul.addr %s443, 8
        %s445 = scalar_lea.vmem [#allocation4], %s444
        %p446 = scmp.lt.s32.totalorder %s31, 1
        %s447 = scalar_select %p446, %s31, 1
        %s448 = smul.addr %s447, 8
        %s449 = scalar_lea.vmem %s0, %s448
        %p451 = scmp.eq.s32.totalorder %s32, 0
        // Predicated region
        $region73: #{tpu_custom_call.1} parent=71 // pred_check
          %p452 = pneg %p451
        $region74: #{tpu_custom_call.1} parent=71 // pred_check_branch
          %454 = sbr.rel (%p452) target = $region76
        $region75: #{tpu_custom_call.1} parent=71 // pred_region
          %v455 = vld [vmem:[%s449] sm:$0xff]
          %v456 = vpack.c.bf16 %v455, %v455
          %v457 = vld [vmem:[%s2] sm:$0xf]
          %v458 = vld [vmem:[%s2 + $0x4] sm:$0xf]
          %v459 = vld [vmem:[%s2 + $0x8] sm:$0xf]
          %v460 = vld [vmem:[%s2 + $0xc] sm:$0xf]
          %v461 = vld [vmem:[%s2 + $0x10] sm:$0xf]
          %v462 = vld [vmem:[%s2 + $0x14] sm:$0xf]
          %v463 = vld [vmem:[%s2 + $0x18] sm:$0xf]
          %v464 = vld [vmem:[%s2 + $0x1c] sm:$0xf]
          %v465 = vld [vmem:[%s2 + $0x20] sm:$0xf]
          %v466 = vld [vmem:[%s2 + $0x24] sm:$0xf]
          %v467 = vld [vmem:[%s2 + $0x28] sm:$0xf]
          %v468 = vld [vmem:[%s2 + $0x2c] sm:$0xf]
          %v469 = vld [vmem:[%s2 + $0x30] sm:$0xf]
          %v470 = vld [vmem:[%s2 + $0x34] sm:$0xf]
          %v471 = vld [vmem:[%s2 + $0x38] sm:$0xf]
          %v472 = vld [vmem:[%s2 + $0x3c] sm:$0xf]
          %v477 = vunpack.c.l.b16 %v457
          %v478 = vunpack.c.l.b16 %v458
          %v479 = vunpack.c.l.b16 %v459
          %v480 = vunpack.c.l.b16 %v460
          %v481 = vpack.c.b16 %v478, %v477
          %v482 = vpack.c.b16 %v480, %v479
          %vm485 = vcmask 261120
          %v487 = vsel %vm485, %v456, 0
          %489 = vmatpush.bf16.msra.mxu0 0
          %490 = vmatpush.bf16.msra.mxu0 0
          %491 = vmatpush.bf16.msra.mxu0 0
          %492 = vmatpush.bf16.msra.mxu0 0
          %493 = vmatpush.bf16.msra.mxu0 0
          %494 = vmatpush.bf16.msra.mxu0 0
          %495 = vmatpush.bf16.msra.mxu0 %v482
          %496 = vmatpush.bf16.msra.mxu0 %v481
          %497 = vmatmul.bf16.gmra.mxu0 %v487
          %v498 = vpop.f32.mrf.mxu0
          %v499 = vadd.f32 0.0, %v498
          %v500 = vpop.f32.mrf.mxu0
          %501 = vdwg.mxu0
          %v506 = vunpack.c.l.b16 %v461
          %v507 = vunpack.c.l.b16 %v462
          %v508 = vunpack.c.l.b16 %v463
          %v509 = vunpack.c.l.b16 %v464
          %v510 = vpack.c.b16 %v507, %v506
          %v511 = vpack.c.b16 %v509, %v508
          %514 = vmatpush.bf16.msra.mxu0 0
          %515 = vmatpush.bf16.msra.mxu0 0
          %516 = vmatpush.bf16.msra.mxu0 0
          %517 = vmatpush.bf16.msra.mxu0 0
          %518 = vmatpush.bf16.msra.mxu0 0
          %519 = vmatpush.bf16.msra.mxu0 0
          %520 = vmatpush.bf16.msra.mxu0 %v511
          %521 = vmatpush.bf16.msra.mxu0 %v510
          %522 = vmatmul.bf16.gmra.mxu0 %v487
          %v523 = vpop.f32.mrf.mxu0
          %v524 = vadd.f32 0.0, %v523
          %v525 = vpop.f32.mrf.mxu0
          %526 = vdwg.mxu0
          %v531 = vunpack.c.l.b16 %v465
          %v532 = vunpack.c.l.b16 %v466
          %v533 = vunpack.c.l.b16 %v467
          %v534 = vunpack.c.l.b16 %v468
          %v535 = vpack.c.b16 %v532, %v531
          %v536 = vpack.c.b16 %v534, %v533
          %539 = vmatpush.bf16.msra.mxu0 0
          %540 = vmatpush.bf16.msra.mxu0 0
          %541 = vmatpush.bf16.msra.mxu0 0
          %542 = vmatpush.bf16.msra.mxu0 0
          %543 = vmatpush.bf16.msra.mxu0 0
          %544 = vmatpush.bf16.msra.mxu0 0
          %545 = vmatpush.bf16.msra.mxu0 %v536
          %546 = vmatpush.bf16.msra.mxu0 %v535
          %547 = vmatmul.bf16.gmra.mxu0 %v487
          %v548 = vpop.f32.mrf.mxu0
          %v549 = vadd.f32 0.0, %v548
          %v550 = vpop.f32.mrf.mxu0
          %551 = vdwg.mxu0
          %v556 = vunpack.c.l.b16 %v469
          %v557 = vunpack.c.l.b16 %v470
          %v558 = vunpack.c.l.b16 %v471
          %v559 = vunpack.c.l.b16 %v472
          %v560 = vpack.c.b16 %v557, %v556
          %v561 = vpack.c.b16 %v559, %v558
          %564 = vmatpush.bf16.msra.mxu0 0
          %565 = vmatpush.bf16.msra.mxu0 0
          %566 = vmatpush.bf16.msra.mxu0 0
          %567 = vmatpush.bf16.msra.mxu0 0
          %568 = vmatpush.bf16.msra.mxu0 0
          %569 = vmatpush.bf16.msra.mxu0 0
          %570 = vmatpush.bf16.msra.mxu0 %v561
          %571 = vmatpush.bf16.msra.mxu0 %v560
          %572 = vmatmul.bf16.gmra.mxu0 %v487
          %v573 = vpop.f32.mrf.mxu0
          %v574 = vadd.f32 0.0, %v573
          %v575 = vpop.f32.mrf.mxu0
          %576 = vdwg.mxu0
          %v577 = vpack.c.bf16 %v499, %v499
          %v578 = vpack.c.bf16 %v524, %v524
          %v579 = vpack.c.bf16 %v549, %v549
          %v580 = vpack.c.bf16 %v574, %v574
          %vm581 = vcmask 60416
          %582 = vst.msk [vmem:[#allocation2] sm:$0xf] %vm581, %v577
          %583 = vst.msk [vmem:[#allocation2 + $0x4] sm:$0xf] %vm581, %v578
          %584 = vst.msk [vmem:[#allocation2 + $0x8] sm:$0xf] %vm581, %v579
          %585 = vst.msk [vmem:[#allocation2 + $0xc] sm:$0xf] %vm581, %v580
          %v586 = vld [vmem:[%s3] sm:$0xf]
          %v587 = vld [vmem:[%s3 + $0x4] sm:$0xf]
          %v588 = vld [vmem:[%s3 + $0x8] sm:$0xf]
          %v589 = vld [vmem:[%s3 + $0xc] sm:$0xf]
          %v590 = vld [vmem:[%s3 + $0x10] sm:$0xf]
          %v591 = vld [vmem:[%s3 + $0x14] sm:$0xf]
          %v592 = vld [vmem:[%s3 + $0x18] sm:$0xf]
          %v593 = vld [vmem:[%s3 + $0x1c] sm:$0xf]
          %v594 = vld [vmem:[%s3 + $0x20] sm:$0xf]
          %v595 = vld [vmem:[%s3 + $0x24] sm:$0xf]
          %v596 = vld [vmem:[%s3 + $0x28] sm:$0xf]
          %v597 = vld [vmem:[%s3 + $0x2c] sm:$0xf]
          %v598 = vld [vmem:[%s3 + $0x30] sm:$0xf]
          %v599 = vld [vmem:[%s3 + $0x34] sm:$0xf]
          %v600 = vld [vmem:[%s3 + $0x38] sm:$0xf]
          %v601 = vld [vmem:[%s3 + $0x3c] sm:$0xf]
          %v606 = vunpack.c.l.b16 %v586
          %v607 = vunpack.c.l.b16 %v587
          %v608 = vunpack.c.l.b16 %v588
          %v609 = vunpack.c.l.b16 %v589
          %v610 = vpack.c.b16 %v607, %v606
          %v611 = vpack.c.b16 %v609, %v608
          %614 = vmatpush.bf16.msra.mxu0 0
          %615 = vmatpush.bf16.msra.mxu0 0
          %616 = vmatpush.bf16.msra.mxu0 0
          %617 = vmatpush.bf16.msra.mxu0 0
          %618 = vmatpush.bf16.msra.mxu0 0
          %619 = vmatpush.bf16.msra.mxu0 0
          %620 = vmatpush.bf16.msra.mxu0 %v611
          %621 = vmatpush.bf16.msra.mxu0 %v610
          %622 = vmatmul.bf16.gmra.mxu0 %v487
          %v623 = vpop.f32.mrf.mxu0
          %v624 = vadd.f32 0.0, %v623
          %v625 = vpop.f32.mrf.mxu0
          %626 = vdwg.mxu0
          %v631 = vunpack.c.l.b16 %v590
          %v632 = vunpack.c.l.b16 %v591
          %v633 = vunpack.c.l.b16 %v592
          %v634 = vunpack.c.l.b16 %v593
          %v635 = vpack.c.b16 %v632, %v631
          %v636 = vpack.c.b16 %v634, %v633
          %639 = vmatpush.bf16.msra.mxu0 0
          %640 = vmatpush.bf16.msra.mxu0 0
          %641 = vmatpush.bf16.msra.mxu0 0
          %642 = vmatpush.bf16.msra.mxu0 0
          %643 = vmatpush.bf16.msra.mxu0 0
          %644 = vmatpush.bf16.msra.mxu0 0
          %645 = vmatpush.bf16.msra.mxu0 %v636
          %646 = vmatpush.bf16.msra.mxu0 %v635
          %647 = vmatmul.bf16.gmra.mxu0 %v487
          %v648 = vpop.f32.mrf.mxu0
          %v649 = vadd.f32 0.0, %v648
          %v650 = vpop.f32.mrf.mxu0
          %651 = vdwg.mxu0
          %v656 = vunpack.c.l.b16 %v594
          %v657 = vunpack.c.l.b16 %v595
          %v658 = vunpack.c.l.b16 %v596
          %v659 = vunpack.c.l.b16 %v597
          %v660 = vpack.c.b16 %v657, %v656
          %v661 = vpack.c.b16 %v659, %v658
          %664 = vmatpush.bf16.msra.mxu0 0
          %665 = vmatpush.bf16.msra.mxu0 0
          %666 = vmatpush.bf16.msra.mxu0 0
          %667 = vmatpush.bf16.msra.mxu0 0
          %668 = vmatpush.bf16.msra.mxu0 0
          %669 = vmatpush.bf16.msra.mxu0 0
          %670 = vmatpush.bf16.msra.mxu0 %v661
          %671 = vmatpush.bf16.msra.mxu0 %v660
          %672 = vmatmul.bf16.gmra.mxu0 %v487
          %v673 = vpop.f32.mrf.mxu0
          %v674 = vadd.f32 0.0, %v673
          %v675 = vpop.f32.mrf.mxu0
          %676 = vdwg.mxu0
          %v681 = vunpack.c.l.b16 %v598
          %v682 = vunpack.c.l.b16 %v599
          %v683 = vunpack.c.l.b16 %v600
          %v684 = vunpack.c.l.b16 %v601
          %v685 = vpack.c.b16 %v682, %v681
          %v686 = vpack.c.b16 %v684, %v683
          %689 = vmatpush.bf16.msra.mxu0 0
          %690 = vmatpush.bf16.msra.mxu0 0
          %691 = vmatpush.bf16.msra.mxu0 0
          %692 = vmatpush.bf16.msra.mxu0 0
          %693 = vmatpush.bf16.msra.mxu0 0
          %694 = vmatpush.bf16.msra.mxu0 0
          %695 = vmatpush.bf16.msra.mxu0 %v686
          %696 = vmatpush.bf16.msra.mxu0 %v685
          %697 = vmatmul.bf16.gmra.mxu0 %v487
          %v698 = vpop.f32.mrf.mxu0
          %v699 = vadd.f32 0.0, %v698
          %v700 = vpop.f32.mrf.mxu0
          %701 = vdwg.mxu0
          %v702 = vpack.c.bf16 %v624, %v624
          %v703 = vpack.c.bf16 %v649, %v649
          %v704 = vpack.c.bf16 %v674, %v674
          %v705 = vpack.c.bf16 %v699, %v699
          %706 = vst.msk [vmem:[#allocation3] sm:$0xf] %vm581, %v702
          %707 = vst.msk [vmem:[#allocation3 + $0x4] sm:$0xf] %vm581, %v703
          %708 = vst.msk [vmem:[#allocation3 + $0x8] sm:$0xf] %vm581, %v704
          %709 = vst.msk [vmem:[#allocation3 + $0xc] sm:$0xf] %vm581, %v705
        $region76: #{tpu_custom_call.1} parent=71 // pred_fallthru
          _
        %s710 = smul.u32 %s32, 8
        %s711 = scalar_lea.vmem %s449, %s710
        %v712 = vld [vmem:[%s711] sm:$0xff]
        %v713 = vpack.c.bf16 %v712, %v712
        %v714 = vld [vmem:[%s1] sm:$0xf]
        %v715 = vld [vmem:[%s1 + $0x4] sm:$0xf]
        %v716 = vld [vmem:[%s1 + $0x8] sm:$0xf]
        %v717 = vld [vmem:[%s1 + $0xc] sm:$0xf]
        %v718 = vld [vmem:[%s1 + $0x10] sm:$0xf]
        %v719 = vld [vmem:[%s1 + $0x14] sm:$0xf]
        %v720 = vld [vmem:[%s1 + $0x18] sm:$0xf]
        %v721 = vld [vmem:[%s1 + $0x1c] sm:$0xf]
        %v722 = vld [vmem:[%s1 + $0x20] sm:$0xf]
        %v723 = vld [vmem:[%s1 + $0x24] sm:$0xf]
        %v724 = vld [vmem:[%s1 + $0x28] sm:$0xf]
        %v725 = vld [vmem:[%s1 + $0x2c] sm:$0xf]
        %v726 = vld [vmem:[%s1 + $0x30] sm:$0xf]
        %v727 = vld [vmem:[%s1 + $0x34] sm:$0xf]
        %v728 = vld [vmem:[%s1 + $0x38] sm:$0xf]
        %v729 = vld [vmem:[%s1 + $0x3c] sm:$0xf]
        %v734 = vunpack.c.l.b16 %v714
        %v735 = vunpack.c.l.b16 %v715
        %v736 = vunpack.c.l.b16 %v716
        %v737 = vunpack.c.l.b16 %v717
        %v738 = vpack.c.b16 %v735, %v734
        %v739 = vpack.c.b16 %v737, %v736
        %vm742 = vcmask 261120
        %v744 = vsel %vm742, %v713, 0
        %746 = vmatpush.bf16.msra.mxu0 0
        %747 = vmatpush.bf16.msra.mxu0 0
        %748 = vmatpush.bf16.msra.mxu0 0
        %749 = vmatpush.bf16.msra.mxu0 0
        %750 = vmatpush.bf16.msra.mxu0 0
        %751 = vmatpush.bf16.msra.mxu0 0
        %752 = vmatpush.bf16.msra.mxu0 %v739
        %753 = vmatpush.bf16.msra.mxu0 %v738
        %754 = vmatmul.bf16.gmra.mxu0 %v744
        %v755 = vpop.f32.mrf.mxu0
        %v756 = vadd.f32 0.0, %v755
        %v757 = vpop.f32.mrf.mxu0
        %758 = vdwg.mxu0
        %v763 = vunpack.c.l.b16 %v718
        %v764 = vunpack.c.l.b16 %v719
        %v765 = vunpack.c.l.b16 %v720
        %v766 = vunpack.c.l.b16 %v721
        %v767 = vpack.c.b16 %v764, %v763
        %v768 = vpack.c.b16 %v766, %v765
        %771 = vmatpush.bf16.msra.mxu0 0
        %772 = vmatpush.bf16.msra.mxu0 0
        %773 = vmatpush.bf16.msra.mxu0 0
        %774 = vmatpush.bf16.msra.mxu0 0
        %775 = vmatpush.bf16.msra.mxu0 0
        %776 = vmatpush.bf16.msra.mxu0 0
        %777 = vmatpush.bf16.msra.mxu0 %v768
        %778 = vmatpush.bf16.msra.mxu0 %v767
        %779 = vmatmul.bf16.gmra.mxu0 %v744
        %v780 = vpop.f32.mrf.mxu0
        %v781 = vadd.f32 0.0, %v780
        %v782 = vpop.f32.mrf.mxu0
        %783 = vdwg.mxu0
        %v788 = vunpack.c.l.b16 %v722
        %v789 = vunpack.c.l.b16 %v723
        %v790 = vunpack.c.l.b16 %v724
        %v791 = vunpack.c.l.b16 %v725
        %v792 = vpack.c.b16 %v789, %v788
        %v793 = vpack.c.b16 %v791, %v790
        %796 = vmatpush.bf16.msra.mxu0 0
        %797 = vmatpush.bf16.msra.mxu0 0
        %798 = vmatpush.bf16.msra.mxu0 0
        %799 = vmatpush.bf16.msra.mxu0 0
        %800 = vmatpush.bf16.msra.mxu0 0
        %801 = vmatpush.bf16.msra.mxu0 0
        %802 = vmatpush.bf16.msra.mxu0 %v793
        %803 = vmatpush.bf16.msra.mxu0 %v792
        %804 = vmatmul.bf16.gmra.mxu0 %v744
        %v805 = vpop.f32.mrf.mxu0
        %v806 = vadd.f32 0.0, %v805
        %v807 = vpop.f32.mrf.mxu0
        %808 = vdwg.mxu0
        %v813 = vunpack.c.l.b16 %v726
        %v814 = vunpack.c.l.b16 %v727
        %v815 = vunpack.c.l.b16 %v728
        %v816 = vunpack.c.l.b16 %v729
        %v817 = vpack.c.b16 %v814, %v813
        %v818 = vpack.c.b16 %v816, %v815
        %821 = vmatpush.bf16.msra.mxu0 0
        %822 = vmatpush.bf16.msra.mxu0 0
        %823 = vmatpush.bf16.msra.mxu0 0
        %824 = vmatpush.bf16.msra.mxu0 0
        %825 = vmatpush.bf16.msra.mxu0 0
        %826 = vmatpush.bf16.msra.mxu0 0
        %827 = vmatpush.bf16.msra.mxu0 %v818
        %828 = vmatpush.bf16.msra.mxu0 %v817
        %829 = vmatmul.bf16.gmra.mxu0 %v744
        %v830 = vpop.f32.mrf.mxu0
        %v831 = vadd.f32 0.0, %v830
        %v832 = vpop.f32.mrf.mxu0
        %833 = vdwg.mxu0
        %v834 = vpack.c.bf16 %v756, %v756
        %v835 = vpack.c.bf16 %v781, %v781
        %v836 = vpack.c.bf16 %v806, %v806
        %v837 = vpack.c.bf16 %v831, %v831
        %v838 = vld [vmem:[#allocation2] sm:$0xf]
        %v839 = vld [vmem:[#allocation2 + $0x4] sm:$0xf]
        %v840 = vld [vmem:[#allocation2 + $0x8] sm:$0xf]
        %v841 = vld [vmem:[#allocation2 + $0xc] sm:$0xf]
        %vm842 = vcmask 64512
        %v844 = vsel %vm842, %v834, 0
        %v847 = vsel %vm842, %v838, 0
        %849 = vmatpush.bf16.xpose.msra.mxu0 0
        %850 = vmatpush.bf16.xpose.msra.mxu0 0
        %851 = vmatpush.bf16.xpose.msra.mxu0 0
        %852 = vmatpush.bf16.xpose.msra.mxu0 0
        %853 = vmatpush.bf16.xpose.msra.mxu0 0
        %854 = vmatpush.bf16.xpose.msra.mxu0 0
        %855 = vmatpush.bf16.xpose.msra.mxu0 0
        %856 = vmatpush.bf16.xpose.msra.mxu0 %v847
        %857 = vmatmul.bf16.gmra.mxu0 %v844
        %v858 = vpop.f32.mrf.mxu0
        %v859 = vadd.f32 0.0, %v858
        %v860 = vpop.f32.mrf.mxu0
        %861 = vdwg.mxu0
        %v863 = vsel %vm842, %v835, 0
        %v866 = vsel %vm842, %v839, 0
        %868 = vmatpush.bf16.xpose.msra.mxu0 0
        %869 = vmatpush.bf16.xpose.msra.mxu0 0
        %870 = vmatpush.bf16.xpose.msra.mxu0 0
        %871 = vmatpush.bf16.xpose.msra.mxu0 0
        %872 = vmatpush.bf16.xpose.msra.mxu0 0
        %873 = vmatpush.bf16.xpose.msra.mxu0 0
        %874 = vmatpush.bf16.xpose.msra.mxu0 0
        %875 = vmatpush.bf16.xpose.msra.mxu0 %v866
        %876 = vmatmul.bf16.gmra.mxu0 %v863
        %v877 = vpop.f32.mrf.mxu0
        %v878 = vadd.f32 0.0, %v877
        %v879 = vpop.f32.mrf.mxu0
        %880 = vdwg.mxu0
        %v882 = vsel %vm842, %v836, 0
        %v885 = vsel %vm842, %v840, 0
        %887 = vmatpush.bf16.xpose.msra.mxu0 0
        %888 = vmatpush.bf16.xpose.msra.mxu0 0
        %889 = vmatpush.bf16.xpose.msra.mxu0 0
        %890 = vmatpush.bf16.xpose.msra.mxu0 0
        %891 = vmatpush.bf16.xpose.msra.mxu0 0
        %892 = vmatpush.bf16.xpose.msra.mxu0 0
        %893 = vmatpush.bf16.xpose.msra.mxu0 0
        %894 = vmatpush.bf16.xpose.msra.mxu0 %v885
        %895 = vmatmul.bf16.gmra.mxu0 %v882
        %v896 = vpop.f32.mrf.mxu0
        %v897 = vadd.f32 0.0, %v896
        %v898 = vpop.f32.mrf.mxu0
        %899 = vdwg.mxu0
        %v901 = vsel %vm842, %v837, 0
        %v904 = vsel %vm842, %v841, 0
        %906 = vmatpush.bf16.xpose.msra.mxu0 0
        %907 = vmatpush.bf16.xpose.msra.mxu0 0
        %908 = vmatpush.bf16.xpose.msra.mxu0 0
        %909 = vmatpush.bf16.xpose.msra.mxu0 0
        %910 = vmatpush.bf16.xpose.msra.mxu0 0
        %911 = vmatpush.bf16.xpose.msra.mxu0 0
        %912 = vmatpush.bf16.xpose.msra.mxu0 0
        %913 = vmatpush.bf16.xpose.msra.mxu0 %v904
        %914 = vmatmul.bf16.gmra.mxu0 %v901
        %v915 = vpop.f32.mrf.mxu0
        %v916 = vadd.f32 0.0, %v915
        %v917 = vpop.f32.mrf.mxu0
        %918 = vdwg.mxu0
        %v919 = vsel %vm842, %v859, -inf
        %920 = vmax.xlane.f32.xlu0 %v919
        %v921 = vpop.xlane.xlu0 %920
        %v922 = vsel %vm842, %v878, -inf
        %923 = vmax.xlane.f32.xlu0 %v922
        %v924 = vpop.xlane.xlu0 %923
        %v925 = vsel %vm842, %v897, -inf
        %926 = vmax.xlane.f32.xlu0 %v925
        %v927 = vpop.xlane.xlu0 %926
        %v928 = vsel %vm842, %v916, -inf
        %929 = vmax.xlane.f32.xlu0 %v928
        %v930 = vpop.xlane.xlu0 %929
        %v931 = vsub.f32 %v859, %v921
        %v932 = vsub.f32 %v878, %v924
        %v933 = vsub.f32 %v897, %v927
        %v934 = vsub.f32 %v916, %v930
        %v935 = vmul.f32 %v931, 1.442695
        %v936 = vpow.pop %v935
        %v937 = vmul.f32 %v932, 1.442695
        %v938 = vpow.pop %v937
        %v939 = vmul.f32 %v933, 1.442695
        %v940 = vpow.pop %v939
        %v941 = vmul.f32 %v934, 1.442695
        %v942 = vpow.pop %v941
        %v943 = vsel %vm842, %v936, 0.0
        %944 = vadd.xlane.f32.xlu0 %v943
        %v945 = vpop.xlane.xlu0 %944
        %v946 = vsel %vm842, %v938, 0.0
        %947 = vadd.xlane.f32.xlu0 %v946
        %v948 = vpop.xlane.xlu0 %947
        %v949 = vsel %vm842, %v940, 0.0
        %950 = vadd.xlane.f32.xlu0 %v949
        %v951 = vpop.xlane.xlu0 %950
        %v952 = vsel %vm842, %v942, 0.0
        %953 = vadd.xlane.f32.xlu0 %v952
        %v954 = vpop.xlane.xlu0 %953
        %v955 = vrcp.pop %v945
        %v956 = vrcp.pop %v948
        %v957 = vrcp.pop %v951
        %v958 = vrcp.pop %v954
        %v959 = vmul.f32 %v936, %v955
        %v960 = vmul.f32 %v938, %v956
        %v961 = vmul.f32 %v940, %v957
        %v962 = vmul.f32 %v942, %v958
        %v963 = vpack.c.bf16 %v959, %v959
        %v964 = vpack.c.bf16 %v960, %v960
        %v965 = vpack.c.bf16 %v961, %v961
        %v966 = vpack.c.bf16 %v962, %v962
        %v967 = vld [vmem:[#allocation3] sm:$0xf]
        %v968 = vld [vmem:[#allocation3 + $0x4] sm:$0xf]
        %v969 = vld [vmem:[#allocation3 + $0x8] sm:$0xf]
        %v970 = vld [vmem:[#allocation3 + $0xc] sm:$0xf]
        %v972 = vsel %vm842, %v963, 0
        %vm974 = vcmask 1043456
        %v976 = vsel %vm974, %v967, 0
        %978 = vmatpush.bf16.msra.mxu0 0
        %979 = vmatpush.bf16.msra.mxu0 0
        %980 = vmatpush.bf16.msra.mxu0 0
        %981 = vmatpush.bf16.msra.mxu0 0
        %982 = vmatpush.bf16.msra.mxu0 0
        %983 = vmatpush.bf16.msra.mxu0 0
        %984 = vmatpush.bf16.msra.mxu0 0
        %985 = vmatpush.bf16.msra.mxu0 %v976
        %986 = vmatmul.bf16.gmra.mxu0 %v972
        %v987 = vpop.f32.mrf.mxu0
        %v988 = vadd.f32 0.0, %v987
        %v989 = vpop.f32.mrf.mxu0
        %990 = vdwg.mxu0
        %v992 = vsel %vm842, %v964, 0
        %v995 = vsel %vm974, %v968, 0
        %997 = vmatpush.bf16.msra.mxu0 0
        %998 = vmatpush.bf16.msra.mxu0 0
        %999 = vmatpush.bf16.msra.mxu0 0
        %1000 = vmatpush.bf16.msra.mxu0 0
        %1001 = vmatpush.bf16.msra.mxu0 0
        %1002 = vmatpush.bf16.msra.mxu0 0
        %1003 = vmatpush.bf16.msra.mxu0 0
        %1004 = vmatpush.bf16.msra.mxu0 %v995
        %1005 = vmatmul.bf16.gmra.mxu0 %v992
        %v1006 = vpop.f32.mrf.mxu0
        %v1007 = vadd.f32 0.0, %v1006
        %v1008 = vpop.f32.mrf.mxu0
        %1009 = vdwg.mxu0
        %v1011 = vsel %vm842, %v965, 0
        %v1014 = vsel %vm974, %v969, 0
        %1016 = vmatpush.bf16.msra.mxu0 0
        %1017 = vmatpush.bf16.msra.mxu0 0
        %1018 = vmatpush.bf16.msra.mxu0 0
        %1019 = vmatpush.bf16.msra.mxu0 0
        %1020 = vmatpush.bf16.msra.mxu0 0
        %1021 = vmatpush.bf16.msra.mxu0 0
        %1022 = vmatpush.bf16.msra.mxu0 0
        %1023 = vmatpush.bf16.msra.mxu0 %v1014
        %1024 = vmatmul.bf16.gmra.mxu0 %v1011
        %v1025 = vpop.f32.mrf.mxu0
        %v1026 = vadd.f32 0.0, %v1025
        %v1027 = vpop.f32.mrf.mxu0
        %1028 = vdwg.mxu0
        %v1030 = vsel %vm842, %v966, 0
        %v1033 = vsel %vm974, %v970, 0
        %1035 = vmatpush.bf16.msra.mxu0 0
        %1036 = vmatpush.bf16.msra.mxu0 0
        %1037 = vmatpush.bf16.msra.mxu0 0
        %1038 = vmatpush.bf16.msra.mxu0 0
        %1039 = vmatpush.bf16.msra.mxu0 0
        %1040 = vmatpush.bf16.msra.mxu0 0
        %1041 = vmatpush.bf16.msra.mxu0 0
        %1042 = vmatpush.bf16.msra.mxu0 %v1033
        %1043 = vmatmul.bf16.gmra.mxu0 %v1030
        %v1044 = vpop.f32.mrf.mxu0
        %v1045 = vadd.f32 0.0, %v1044
        %v1046 = vpop.f32.mrf.mxu0
        %1047 = vdwg.mxu0
        %v1048 = vpack.c.bf16 %v988, %v988
        %v1049 = vpack.c.bf16 %v1007, %v1007
        %v1050 = vpack.c.bf16 %v1026, %v1026
        %v1051 = vpack.c.bf16 %v1045, %v1045
        %v1052 = vld [vmem:[%s4] sm:$0xf]
        %v1053 = vld [vmem:[%s4 + $0x4] sm:$0xf]
        %v1054 = vld [vmem:[%s4 + $0x8] sm:$0xf]
        %v1055 = vld [vmem:[%s4 + $0xc] sm:$0xf]
        %v1057 = vsel %vm842, %v1048, 0
        %v1060 = vsel %vm974, %v1052, 0
        %1062 = vmatpush.bf16.msra.mxu0 0
        %1063 = vmatpush.bf16.msra.mxu0 0
        %1064 = vmatpush.bf16.msra.mxu0 0
        %1065 = vmatpush.bf16.msra.mxu0 0
        %1066 = vmatpush.bf16.msra.mxu0 0
        %1067 = vmatpush.bf16.msra.mxu0 0
        %1068 = vmatpush.bf16.msra.mxu0 0
        %1069 = vmatpush.bf16.msra.mxu0 %v1060
        %1070 = vmatmul.bf16.gmra.mxu0 %v1057
        %v1071 = vpop.f32.mrf.mxu0
        %v1072 = vadd.f32 0.0, %v1071
        %v1073 = vpop.f32.mrf.mxu0
        %1074 = vdwg.mxu0
        %v1076 = vsel %vm842, %v1049, 0
        %v1079 = vsel %vm974, %v1053, 0
        %1081 = vmatpush.bf16.msra.mxu0 0
        %1082 = vmatpush.bf16.msra.mxu0 0
        %1083 = vmatpush.bf16.msra.mxu0 0
        %1084 = vmatpush.bf16.msra.mxu0 0
        %1085 = vmatpush.bf16.msra.mxu0 0
        %1086 = vmatpush.bf16.msra.mxu0 0
        %1087 = vmatpush.bf16.msra.mxu0 0
        %1088 = vmatpush.bf16.msra.mxu0 %v1079
        %1089 = vmatmul.bf16.gmra.mxu0 %v1076
        %v1090 = vpop.f32.mrf.mxu0
        %v1091 = vadd.f32 0.0, %v1090
        %v1092 = vpop.f32.mrf.mxu0
        %1093 = vdwg.mxu0
        %v1095 = vsel %vm842, %v1050, 0
        %v1098 = vsel %vm974, %v1054, 0
        %1100 = vmatpush.bf16.msra.mxu0 0
        %1101 = vmatpush.bf16.msra.mxu0 0
        %1102 = vmatpush.bf16.msra.mxu0 0
        %1103 = vmatpush.bf16.msra.mxu0 0
        %1104 = vmatpush.bf16.msra.mxu0 0
        %1105 = vmatpush.bf16.msra.mxu0 0
        %1106 = vmatpush.bf16.msra.mxu0 0
        %1107 = vmatpush.bf16.msra.mxu0 %v1098
        %1108 = vmatmul.bf16.gmra.mxu0 %v1095
        %v1109 = vpop.f32.mrf.mxu0
        %v1110 = vadd.f32 0.0, %v1109
        %v1111 = vpop.f32.mrf.mxu0
        %1112 = vdwg.mxu0
        %v1114 = vsel %vm842, %v1051, 0
        %v1117 = vsel %vm974, %v1055, 0
        %1119 = vmatpush.bf16.msra.mxu0 0
        %1120 = vmatpush.bf16.msra.mxu0 0
        %1121 = vmatpush.bf16.msra.mxu0 0
        %1122 = vmatpush.bf16.msra.mxu0 0
        %1123 = vmatpush.bf16.msra.mxu0 0
        %1124 = vmatpush.bf16.msra.mxu0 0
        %1125 = vmatpush.bf16.msra.mxu0 0
        %1126 = vmatpush.bf16.msra.mxu0 %v1117
        %1127 = vmatmul.bf16.gmra.mxu0 %v1114
        %v1128 = vpop.f32.mrf.mxu0
        %v1129 = vadd.f32 0.0, %v1128
        %v1130 = vpop.f32.mrf.mxu0
        %1131 = vdwg.mxu0
        %v1132 = vsel %vm742, %v1072, 0.0
        %v1133 = vsel %vm742, %v1091, 0.0
        %v1134 = vadd.f32 %v1132, %v1133
        %v1135 = vsel %vm742, %v1110, 0.0
        %v1136 = vadd.f32 %v1134, %v1135
        %v1137 = vsel %vm742, %v1129, 0.0
        %v1138 = vadd.f32 %v1136, %v1137
        %v1139 = vadd.f32 %v712, %v1138
        %v1140 = vld [vmem:[%s5] sm:$0x1]
        %v1141 = vld [vmem:[%s6] sm:$0x1]
        %v1142 = vsel %vm742, %v1139, 0.0
        %1143 = vadd.xlane.f32.xlu0 %v1142
        %v1144 = vpop.xlane.xlu0 %1143
        %v1145 = vrcp.pop 32.0
        %v1146 = vmul.f32 32.0, %v1145
        %v1147 = vsub.f32 1.0, %v1146
        %v1148 = vmul.f32 %v1145, %v1147
        %v1149 = vadd.f32 %v1145, %v1148
        %vm1150 = vweird.f32 %v1145
        %v1151 = vsel %vm1150, %v1145, %v1149
        %v1152 = vmul.f32 %v1144, %v1151
        %v1153 = vsub.f32 %v1139, %v1152
        %v1154 = vmul.f32 %v1153, %v1153
        %v1155 = vsel %vm742, %v1154, 0.0
        %1156 = vadd.xlane.f32.xlu0 %v1155
        %v1157 = vpop.xlane.xlu0 %1156
        %v1158 = vmul.f32 %v1157, %v1151
        %v1159 = vadd.f32 %v1158, 1e-05
        %v1160 = vrsqrt.pop %v1159
        %v1161 = vmul.f32 %v1160, %v1159
        %v1162 = vmul.f32 %v1161, %v1160
        %v1163 = vmul.f32 0.5, %v1162
        %v1164 = vsub.f32 1.5, %v1163
        %v1165 = vmul.f32 %v1160, %v1164
        %vm1166 = vweird.f32 %v1159
        %vm1167 = vweird.f32 %v1160
        %vm1168 = vmor %vm1166, %vm1167
        %v1169 = vsel %vm1168, %v1160, %v1165
        %v1170 = vmul.f32 %v1153, %v1169
        %v1172 = vperm.slane %v1140, 0
        %v1174 = vmul.f32 %v1170, %v1172
        %v1176 = vperm.slane %v1141, 0
        %v1178 = vadd.f32 %v1174, %v1176
        %v1179 = vpack.c.bf16 %v1178, %v1178
        %v1180 = vld [vmem:[%s7] sm:$0xf]
        %v1181 = vld [vmem:[%s7 + $0x4] sm:$0xf]
        %v1182 = vld [vmem:[%s7 + $0x8] sm:$0xf]
        %v1183 = vld [vmem:[%s7 + $0xc] sm:$0xf]
        %v1184 = vld [vmem:[%s8] sm:$0x1]
        %v1186 = vperm.slane %v1184, 0
        %v1192 = vunpack.c.l.b16 %v1180
        %v1193 = vunpack.c.l.b16 %v1181
        %v1194 = vunpack.c.l.b16 %v1182
        %v1195 = vunpack.c.l.b16 %v1183
        %v1196 = vpack.c.b16 %v1193, %v1192
        %v1197 = vpack.c.b16 %v1195, %v1194
        %v1201 = vsel %vm742, %v1179, 0
        %1203 = vmatpush.bf16.msra.mxu0 0
        %1204 = vmatpush.bf16.msra.mxu0 0
        %1205 = vmatpush.bf16.msra.mxu0 0
        %1206 = vmatpush.bf16.msra.mxu0 0
        %1207 = vmatpush.bf16.msra.mxu0 0
        %1208 = vmatpush.bf16.msra.mxu0 0
        %1209 = vmatpush.bf16.msra.mxu0 %v1197
        %1210 = vmatpush.bf16.msra.mxu0 %v1196
        %1211 = vmatmul.bf16.gmra.mxu0 %v1201
        %v1212 = vpop.f32.mrf.mxu0
        %v1213 = vadd.f32 %v1186, %v1212
        %v1214 = vpop.f32.mrf.mxu0
        %1215 = vdwg.mxu0
        %v1216 = vmul.f32 %v1213, 0.5
        %v1217 = vmul.f32 %v1213, 0.70710677
        %vm1218 = vcmp.ge.f32.partialorder %v1217, 0.0
        %v1219 = vsel %vm1218, 1.0, -1.0
        %v1220 = vand.u32 2147483647, %v1217
        %v1221 = vmul.f32 %v1220, 0.3275911
        %v1222 = vadd.f32 %v1221, 1.0
        %v1223 = vrcp.pop %v1222
        %v1224 = vmul.f32 %v1222, %v1223
        %v1225 = vsub.f32 1.0, %v1224
        %v1226 = vmul.f32 %v1223, %v1225
        %v1227 = vadd.f32 %v1223, %v1226
        %vm1228 = vweird.f32 %v1222
        %vm1229 = vweird.f32 %v1223
        %vm1230 = vmor %vm1228, %vm1229
        %v1231 = vsel %vm1230, %v1223, %v1227
        %v1232 = vand.u32 2147483647, %v1222
        %vm1233 = vcmp.eq.f32.partialorder %v1232, 8.507059e+37
        %v1234 = vand.u32 %v1222, 2147483648
        %v1235 = vor.u32 1.1754944e-38, %v1234
        %v1236 = vsel %vm1233, %v1235, %v1231
        %v1237 = vmul.f32 1.0, %v1236
        %v1238 = vmul.f32 %v1237, 1.0614054
        %v1239 = vadd.f32 %v1238, -1.4531521
        %v1240 = vmul.f32 %v1239, %v1237
        %v1241 = vadd.f32 %v1240, 1.4214138
        %v1242 = vmul.f32 %v1241, %v1237
        %v1243 = vadd.f32 %v1242, -0.28449672
        %v1244 = vmul.f32 %v1243, %v1237
        %v1245 = vadd.f32 %v1244, 0.2548296
        %v1246 = vmul.f32 %v1245, %v1237
        %v1247 = vsub.f32 0.0, %v1220
        %v1248 = vmul.f32 %v1247, %v1220
        %v1249 = vmul.f32 %v1248, 1.442695
        %v1250 = vpow.pop %v1249
        %v1251 = vmul.f32 %v1246, %v1250
        %v1252 = vsub.f32 1.0, %v1251
        %v1253 = vmul.f32 %v1219, %v1252
        %v1254 = vadd.f32 %v1253, 1.0
        %v1255 = vmul.f32 %v1216, %v1254
        %v1256 = vpack.c.bf16 %v1255, %v1255
        %v1257 = vld [vmem:[%s9] sm:$0xf]
        %v1258 = vld [vmem:[%s9 + $0x4] sm:$0xf]
        %v1259 = vld [vmem:[%s9 + $0x8] sm:$0xf]
        %v1260 = vld [vmem:[%s9 + $0xc] sm:$0xf]
        %v1261 = vld [vmem:[%s9 + $0x10] sm:$0xf]
        %v1262 = vld [vmem:[%s9 + $0x14] sm:$0xf]
        %v1263 = vld [vmem:[%s9 + $0x18] sm:$0xf]
        %v1264 = vld [vmem:[%s9 + $0x1c] sm:$0xf]
        %v1265 = vld [vmem:[%s10] sm:$0x1]
        %v1267 = vperm.slane %v1265, 0
        %v1277 = vunpack.c.l.b16 %v1257
        %v1278 = vunpack.c.l.b16 %v1258
        %v1279 = vunpack.c.l.b16 %v1259
        %v1280 = vunpack.c.l.b16 %v1260
        %v1281 = vunpack.c.l.b16 %v1261
        %v1282 = vunpack.c.l.b16 %v1262
        %v1283 = vunpack.c.l.b16 %v1263
        %v1284 = vunpack.c.l.b16 %v1264
        %v1285 = vpack.c.b16 %v1278, %v1277
        %v1286 = vpack.c.b16 %v1280, %v1279
        %v1287 = vpack.c.b16 %v1282, %v1281
        %v1288 = vpack.c.b16 %v1284, %v1283
        %vm1293 = vcmask 523264
        %v1295 = vsel %vm1293, %v1256, 0
        %1297 = vmatpush.bf16.msra.mxu0 0
        %1298 = vmatpush.bf16.msra.mxu0 0
        %1299 = vmatpush.bf16.msra.mxu0 0
        %1300 = vmatpush.bf16.msra.mxu0 0
        %1301 = vmatpush.bf16.msra.mxu0 %v1288
        %1302 = vmatpush.bf16.msra.mxu0 %v1287
        %1303 = vmatpush.bf16.msra.mxu0 %v1286
        %1304 = vmatpush.bf16.msra.mxu0 %v1285
        %1305 = vmatmul.bf16.gmra.mxu0 %v1295
        %v1306 = vpop.f32.mrf.mxu0
        %v1307 = vadd.f32 %v1267, %v1306
        %v1308 = vpop.f32.mrf.mxu0
        %1309 = vdwg.mxu0
        %v1310 = vadd.f32 %v1178, %v1307
        %v1311 = vld [vmem:[%s11] sm:$0x1]
        %v1312 = vld [vmem:[%s12] sm:$0x1]
        %v1313 = vsel %vm742, %v1310, 0.0
        %1314 = vadd.xlane.f32.xlu0 %v1313
        %v1315 = vpop.xlane.xlu0 %1314
        %v1316 = vmul.f32 %v1315, %v1151
        %v1317 = vsub.f32 %v1310, %v1316
        %v1318 = vmul.f32 %v1317, %v1317
        %v1319 = vsel %vm742, %v1318, 0.0
        %1320 = vadd.xlane.f32.xlu0 %v1319
        %v1321 = vpop.xlane.xlu0 %1320
        %v1322 = vmul.f32 %v1321, %v1151
        %v1323 = vadd.f32 %v1322, 1e-05
        %v1324 = vrsqrt.pop %v1323
        %v1325 = vmul.f32 %v1324, %v1323
        %v1326 = vmul.f32 %v1325, %v1324
        %v1327 = vmul.f32 0.5, %v1326
        %v1328 = vsub.f32 1.5, %v1327
        %v1329 = vmul.f32 %v1324, %v1328
        %vm1330 = vweird.f32 %v1323
        %vm1331 = vweird.f32 %v1324
        %vm1332 = vmor %vm1330, %vm1331
        %v1333 = vsel %vm1332, %v1324, %v1329
        %v1334 = vmul.f32 %v1317, %v1333
        %v1336 = vperm.slane %v1311, 0
        %v1338 = vmul.f32 %v1334, %v1336
        %v1340 = vperm.slane %v1312, 0
        %v1342 = vadd.f32 %v1338, %v1340
        %1343 = vst.msk [vmem:[%s445] sm:$0xff] %vm742, %v1342
        %s1344 = sand.u32 %s327, 1
        %s1345 = scalar_lea.sflag [#allocation5], %s1344
        %s1346 = sand.u32 %s327, 1
        %s1347 = smul.addr %s1346, 8
        %s1348 = scalar_lea.vmem [#allocation4], %s1347
        // Predicated region
        $region77: #{tpu_custom_call.1} parent=71 // pred_check
          %p1349 = pneg %p337
        $region78: #{tpu_custom_call.1} parent=71 // pred_check_branch
          %1351 = sbr.rel (%p1349) target = $region80
        $region79: #{tpu_custom_call.1} parent=71 // pred_region
          %1353 = vsyncadd %s1345, 0
          %s1354 = sadd.s32 %s32, %s31
          %s1355 = smul.addr %s1354, 8
          %s1356 = scalar_lea.hbm %s13, %s1355
          %s1358 = sshll.u32 %s1348, 4
          %s1359 = int_to_ptr.vmem [resolvable:$true] %s1358
          %s1360 = sshll.u32 %s1356, 4
          %s1361 = int_to_ptr.hbm [resolvable:$true] %s1360
          %1363 = dma.vmem_to_hbm [thread:$0]  %s1359, 128, %s1361, %s1345
        $region80: #{tpu_custom_call.1} parent=71 // pred_fallthru
          _
      $region72: #{tpu_custom_call.1} parent=5 // pred_fallthru
        _
      %p1364 = scmp.le.s32.totalorder 2, %s22
      // Predicated region
      $region81: #{tpu_custom_call.1} parent=5 // pred_check
        %p1365 = pneg %p1364
      $region82: #{tpu_custom_call.1} parent=5 // pred_check_branch
        %1367 = sbr.rel (%p1365) target = $region84
      $region83: #{tpu_custom_call.1} parent=5 // pred_region
        %s1368 = ssub.s32 %s22, 2
        // Predicated region
        $region85: #{tpu_custom_call.1} parent=83 // pred_check
          %p1369 = pneg %p343
        $region86: #{tpu_custom_call.1} parent=83 // pred_check_branch
          %1371 = sbr.rel (%p1369) target = $region88
        $region87: #{tpu_custom_call.1} parent=83 // pred_region
          %s1372 = sand.u32 %s328, 1
          %s1373 = scalar_lea.sflag [#allocation5], %s1372
          %s1374 = sand.u32 %s328, 1
          %s1375 = smul.addr %s1374, 8
          %s1376 = scalar_lea.vmem [#allocation4], %s1375
          %1378 = dma.done %s1373, 128
        $region88: #{tpu_custom_call.1} parent=83 // pred_fallthru
          _
      $region84: #{tpu_custom_call.1} parent=5 // pred_fallthru
        _
    $region6: #{tpu_custom_call.1} parent=1 // loop_footer
      %s26 = sadd.s32 1, %s22
    $region7: #{tpu_custom_call.1} parent=1 // loop_footer_branch
      %21 = sbr.rel target = $region3
    $region8: #{tpu_custom_call.1} parent=1 // loop_exit
      _
    %1379 = vsyncpa [#allocation5], 1
    %s1380 = scalar_lea.sflag [#allocation5], 1
    %1381 = vsyncpa %s1380, 1

</llo_original>
